<compile_context>
chip_gen: v7x
topology: tpu7x:2x2x1
jax: 0.10.0
libtpu: 0.0.40
codegen_flags: <defaults>
</compile_context>

<pallas_src>
import functools

import numpy as np

import jax
import jax.numpy as jnp
from jax.experimental import pallas as pl
from jax.experimental.pallas import tpu as pltpu


_ACC_BUDGET_BYTES = 128 * 1024   # keep the live f32 accumulator <= ~32 vregs


# ---------------------------------------------------------------------------
# Fully fused kernel: one grid step = pp (x, target) pairs pushed through the
# whole conv stack, activations never leave VMEM, selected-layer MSE reduced
# to a single per-step scalar written to SMEM.
#
# Conv strategy ("banded row matmul", un-padded in x):
#   * the activation of one image row is kept lane-dense as W*Cin values,
#   * the 3x3 kernel is pre-folded into 3 banded matrices Wband[dy] of shape
#     (W*Cin, W*Cout) with Wband[dy][(x+dx-1)*Cin + c, x*Cout + co] =
#     w[dy, dx, c, co] (taps falling outside [0, W) are simply dropped =
#     zero padding in x),
#   * zero padding in y is a 1-row zero halo in the VMEM activation buffer,
#   * conv = sum_dy  act[:, dy:dy+H, :] @ Wband[dy]  -> 3 MXU contractions
#     with K = W*Cin and N = W*Cout, bf16 operands, f32 accumulation.
# ---------------------------------------------------------------------------
def _fused_perception_kernel(x_ref, t_ref, *refs, layer_dims, sel_norms, H, W, pp):
    n_layers = len(layer_dims)
    w_refs = refs[:n_layers]                        # (3, W*Cin, W*Cout) bf16, resident
    b_refs = refs[n_layers:2 * n_layers]            # (1, W*Cout) f32, resident
    loss_ref = refs[2 * n_layers]                   # (1, 1) f32 SMEM output block
    bufs = refs[2 * n_layers + 1:2 * n_layers + 3]  # ping-pong bf16 activation buffers

    B2 = 2 * pp                                     # images this step: pp x + pp targets
    M = B2 * H                                      # MXU M dimension
    Lmax = bufs[0].shape[-1]

    # Zero the 1-row y-halo (rows 0 and H+1) of both buffers once; only the
    # interior rows are rewritten afterwards, so the halo stays zero for every
    # layer of the stack.
    zrow = jnp.zeros((B2, 1, Lmax), bufs[0].dtype)
    for buf in bufs:
        buf[:, 0:1, :] = zrow
        buf[:, H + 1:H + 2, :] = zrow

    # Stage the pp (x, target) pairs into buffer 0: x images occupy rows
    # [0, pp), targets [pp, 2pp).  The f32 -> bf16 cast happens exactly once.
    L0 = W * layer_dims[0][0]
    bufs[0][0:pp, 1:H + 1, 0:L0] = x_ref[...].astype(bufs[0].dtype)
    bufs[0][pp:B2, 1:H + 1, 0:L0] = t_ref[...].astype(bufs[0].dtype)

    step_loss = jnp.float32(0.0)
    for l in range(n_layers):
        cin, cout = layer_dims[l]
        L_in, L_out = W * cin, W * cout
        src = bufs[l % 2]                           # layer input (bf16, padded in y)
        dst = bufs[1 - (l % 2)]                     # layer output (next layer's input)

        # Output-lane chunking keeps the f32 accumulator <= ~128 KiB (in vregs,
        # no spills) even when pp is raised to fill M, while keeping chunks as
        # wide as the budget allows (full 256 lanes here) so the v6e/v7x MXU N
        # dimension is not split needlessly.
        nt = max(128, (_ACC_BUDGET_BYTES // (4 * M)) // 128 * 128)
        nt = min(nt, L_out)

        for j0 in range(0, L_out, nt):
            nc = min(nt, L_out - j0)
            # Bias-as-init: saves one extra full VPU pass over the accumulator.
            acc = jnp.broadcast_to(b_refs[l][:, j0:j0 + nc],
                                   (M, nc)).astype(jnp.float32)
            for dy in range(3):                     # 3 banded MXU contractions
                lhs = src[:, dy:dy + H, 0:L_in].reshape(M, L_in)   # bf16, no recast
                acc = acc + jnp.dot(lhs, w_refs[l][dy, :, j0:j0 + nc],
                                    preferred_element_type=jnp.float32)
            acc = jnp.maximum(acc, 0.0)             # ReLU (these are the "features")

            if sel_norms[l] is not None:
                # rows [0, pp*H): x features; rows [pp*H, M): target features.
                d = acc[:pp * H, :] - acc[pp * H:, :]
                step_loss = step_loss + jnp.sum(d * d) * jnp.float32(1.0 / sel_norms[l])

            if l + 1 < n_layers:
                # Next layer's input stays on-chip in bf16.  The final selected
                # layer is never written anywhere: only its SSE is consumed.
                dst[:, 1:H + 1, j0:j0 + nc] = acc.reshape(B2, H, nc).astype(dst.dtype)

    # Per-step loss contribution (already normalized per selected layer) as a
    # scalar SMEM output: no tile broadcast, no wrapper-side gather.
    loss_ref[0, 0] = step_loss


def _fused_perception_loss(x_nchw, targets_nchw, layers, ind_layers):
    """Fused forward of PerceptionLoss: sum_i MSE(feat_i(x), feat_i(targets))."""
    ind = sorted(set(int(i) for i in ind_layers))
    if not ind:
        return jnp.float32(0.0)
    assert max(ind) < len(layers), "selected layer index out of range"
    layers = layers[:max(ind) + 1]                  # never run layers past the last used

    # NCHW -> NHWC -> lane-dense (N, H, W*C) rows; target branch is no-grad.
    x = jnp.transpose(x_nchw, (0, 2, 3, 1))
    t = jax.lax.stop_gradient(jnp.transpose(targets_nchw, (0, 2, 3, 1)))
    N, H, W, C0 = x.shape
    x = x.reshape(N, H, W * C0)
    t = t.reshape(N, H, W * C0)

    layer_dims = tuple((cin, cout) for (_, _, cin, cout) in layers)
    Lmax = max([W * C0] + [W * cout for (_, _, _, cout) in layers])

    # Pairs per grid step: fill the MXU M dimension (M = 2*pp*H, target ~256
    # rows for v6e/v7x, >=128 for v5e) as far as the batch allows; output-lane
    # chunking in the kernel keeps the accumulator in-register at any pp.  At
    # realistic batch sizes this also leaves n_steps >= 2 so v7x's two
    # TensorCores both get work via the "parallel" grid axis.
    pp = max(1, min(N, 256 // (2 * H)))
    while N % pp:
        pp -= 1
    n_steps = N // pp

    # nn.MSELoss(reduction='mean'): divide each selected layer's SSE by the
    # FULL-batch element count so summing the per-step contributions gives the
    # mean exactly.
    sel_norms = tuple(
        float(N * H * W * cout) if l in ind else None
        for l, (_, _, _, cout) in enumerate(layers))

    kernel = functools.partial(
        _fused_perception_kernel,
        layer_dims=layer_dims, sel_norms=sel_norms, H=H, W=W, pp=pp)

    in_specs = [
        pl.BlockSpec((pp, H, W * C0), lambda n: (n, 0, 0)),   # x rows
        pl.BlockSpec((pp, H, W * C0), lambda n: (n, 0, 0)),   # target rows
    ]
    w_args, b_args = [], []
    for wband, bias_row, _, _ in layers:
        # Constant block index -> fetched once, stays VMEM-resident across the
        # grid (total bf16 banded weights < 1 MiB for this stack).
        in_specs.append(pl.BlockSpec(wband.shape, lambda n: (0, 0, 0)))
        w_args.append(wband)
    for wband, bias_row, _, _ in layers:
        in_specs.append(pl.BlockSpec(bias_row.shape, lambda n: (0, 0)))
        b_args.append(bias_row)

    # Two ping-pong bf16 activation buffers with a 1-row zero y-halo: the whole
    # conv stack runs out of VMEM with zero inter-layer HBM traffic.
    act_shape = (2 * pp, H + 2, Lmax)
    scratch_shapes = [pltpu.VMEM(act_shape, jnp.bfloat16),
                      pltpu.VMEM(act_shape, jnp.bfloat16)]

    # VMEM budget sized to actual need (pipeline double-buffers the resident
    # weight/bias and input blocks) plus slack for accumulators / compiler
    # internal scratch, instead of a blanket 32 MiB.
    resident = sum(int(a.size) * a.dtype.itemsize for a in w_args + b_args)
    in_block = pp * H * W * C0 * 4
    act_bytes = 2 * int(np.prod(act_shape)) * 2
    vmem_limit = int(2 * (resident + 2 * in_block) + act_bytes + (6 << 20))

    per_step = pl.pallas_call(
        kernel,
        out_shape=jax.ShapeDtypeStruct((n_steps, 1), jnp.float32),
        grid_spec=pltpu.PrefetchScalarGridSpec(
            num_scalar_prefetch=0,
            grid=(n_steps,),
            in_specs=in_specs,
            # Scalar per-step loss -> (1, 1) SMEM block (disjoint per step, so
            # the grid axis can stay "parallel").
            out_specs=pl.BlockSpec((1, 1), lambda n: (n, 0),
                                   memory_space=pltpu.MemorySpace.SMEM),
            scratch_shapes=scratch_shapes,
        ),
        compiler_params=pltpu.CompilerParams(
            dimension_semantics=("parallel",),
            vmem_limit_bytes=vmem_limit,
        ),
    )(x, t, *w_args, *b_args)

    return jnp.sum(per_step)


# ---------------------------------------------------------------------------
# Parameter preprocessing: fold the 3x3 kernel into banded matrices (host-side
# numpy, once at construction).  Taps falling outside [0, W) are dropped,
# which implements the zero padding in x.
# ---------------------------------------------------------------------------
def _band_weights(w_hwio, width, dtype=jnp.bfloat16):
    """w_hwio: (3, 3, Cin, Cout) -> (3, width*Cin, width*Cout) banded."""
    _, _, cin, cout = w_hwio.shape
    wb = np.zeros((3, width * cin, width * cout), np.float32)
    for dy in range(3):
        for dx in range(3):
            for x in range(width):
                s = x + dx - 1
                if 0 <= s < width:
                    wb[dy, s * cin:(s + 1) * cin,
                       x * cout:(x + 1) * cout] = w_hwio[dy, dx]
    return jnp.asarray(wb, dtype)


class TinyFeatureNet:
    """VGG-like stack of 3x3 conv + ReLU layers with a `get_features` method.

    Weights are deterministic; the Pallas path uses the pre-folded banded bf16
    layout, while `get_features` is the pure-JAX f32 reference path (used here
    only for the tolerance check — PerceptionLoss runs the fused kernel).
    """

    def __init__(self, key, channels=(4, 8, 16, 16), spatial=16):
        self.spatial = spatial
        self.params = []    # raw (w_hwio, b) for the f32 reference path
        self.layers = []    # (wband bf16, bias_row f32, cin, cout) for the kernel
        for i in range(len(channels) - 1):
            key, kw, kb = jax.random.split(key, 3)
            cin, cout = channels[i], channels[i + 1]
            w = jax.random.normal(kw, (3, 3, cin, cout), jnp.float32)
            w = w / np.sqrt(9.0 * cin)
            b = 0.01 * jax.random.normal(kb, (cout,), jnp.float32)
            self.params.append((w, b))
            wband = _band_weights(np.asarray(w), spatial)                 # bf16
            bias_row = jnp.tile(b, spatial).reshape(1, spatial * cout)    # f32
            self.layers.append((wband, bias_row, cin, cout))

    def get_features(self, x_nhwc, *ind_layers):
        feats, h = [], x_nhwc
        for i, (w, b) in enumerate(self.params):
            h = jax.lax.conv_general_dilated(
                h, w, window_strides=(1, 1), padding="SAME",
                dimension_numbers=("NHWC", "HWIO", "NHWC"))
            h = jnp.maximum(h + b, 0.0)
            if i in ind_layers:
                feats.append(h)
        return feats


class PerceptionLoss:
    """sum_i MSE(features_i(x), features_i(targets)), features = ReLU outputs.

    Forward matches running get_features on x and on the (no-grad) targets and
    summing nn.MSELoss(reduction='mean') over the selected layers, but the
    whole computation is one fused Pallas kernel (bf16 MXU operands, so expect
    ~1e-2 relative deviation from an f32 reference).
    """

    def __init__(self, model, *ind_layers):
        self.model = model
        self.ind_layers = ind_layers

    def __call__(self, x_nchw, targets_nchw):
        return _fused_perception_loss(x_nchw, targets_nchw,
                                      self.model.layers, self.ind_layers)


def _reference_loss(model, x_nchw, t_nchw, ind_layers):
    """Pure-JAX f32 reference of the PyTorch forward (for the tolerance check)."""
    xf = model.get_features(jnp.transpose(x_nchw, (0, 2, 3, 1)), *ind_layers)
    tf = model.get_features(jnp.transpose(t_nchw, (0, 2, 3, 1)), *ind_layers)
    loss = jnp.float32(0.0)
    for a, b in zip(xf, tf):
        loss = loss + jnp.mean((a - b) ** 2)
    return loss


if __name__ == "__main__":
    key = jax.random.PRNGKey(0)
    kx, kt, km = jax.random.split(key, 3)
    # Small shapes consistent with a conv feature extractor: NCHW (2, 4, 16, 16)
    x = jax.random.normal(kx, (2, 4, 16, 16), jnp.float32)
    targets = jax.random.normal(kt, (2, 4, 16, 16), jnp.float32)

    model = TinyFeatureNet(km, channels=(4, 8, 16, 16), spatial=16)
    perception_loss = PerceptionLoss(model, 0, 2)   # features of layers 0 and 2

    loss_fn = jax.jit(lambda a, b: perception_loss(a, b))
    loss = loss_fn(x, targets)
    jax.block_until_ready(loss)

    # bf16 MXU operands + bf16 on-chip activations -> small (~1%) relative
    # deviation from the f32 reference; check with a generous tolerance.
    ref = _reference_loss(model, x, targets, (0, 2))
    rel = abs(float(loss) - float(ref)) / max(abs(float(ref)), 1e-12)
    assert rel < 0.1, f"pallas={float(loss):.6f} ref={float(ref):.6f} rel={rel:.4f}"
    print("KERNEL_OK")
</pallas_src>

<mosaic_0001>
module attributes {stable_mosaic.version = 11 : i64} {
  func.func @_fused_perception_kernel(%arg0: i32, %arg1: memref<2x16x64xf32, #tpu.memory_space<vmem>>, %arg2: memref<2x16x64xf32, #tpu.memory_space<vmem>>, %arg3: memref<3x64x128xbf16, #tpu.memory_space<vmem>>, %arg4: memref<3x128x256xbf16, #tpu.memory_space<vmem>>, %arg5: memref<3x256x256xbf16, #tpu.memory_space<vmem>>, %arg6: memref<1x128xf32, #tpu.memory_space<vmem>>, %arg7: memref<1x256xf32, #tpu.memory_space<vmem>>, %arg8: memref<1x256xf32, #tpu.memory_space<vmem>>, %arg9: memref<1x1xf32, #tpu.memory_space<smem>>, %arg10: memref<4x18x256xbf16, #tpu.memory_space<vmem>>, %arg11: memref<4x18x256xbf16, #tpu.memory_space<vmem>>) attributes {dimension_semantics = [#tpu.dimension_semantics<parallel>], iteration_bounds = array<i64: 1>, scalar_prefetch = 0 : i64, scratch_operands = 2 : i64, tpu.core_type = #tpu.core_type<tc>, window_params = [{transform_indices = @transform_0, window_bounds = array<i64: 2, 16, 64>}, {transform_indices = @transform_1, window_bounds = array<i64: 2, 16, 64>}, {pipeline_mode = #tpu.pipeline_mode<synchronous>, transform_indices = @transform_2, window_bounds = array<i64: 3, 64, 128>}, {pipeline_mode = #tpu.pipeline_mode<synchronous>, transform_indices = @transform_3, window_bounds = array<i64: 3, 128, 256>}, {pipeline_mode = #tpu.pipeline_mode<synchronous>, transform_indices = @transform_4, window_bounds = array<i64: 3, 256, 256>}, {pipeline_mode = #tpu.pipeline_mode<synchronous>, transform_indices = @transform_5, window_bounds = array<i64: 1, 128>}, {pipeline_mode = #tpu.pipeline_mode<synchronous>, transform_indices = @transform_6, window_bounds = array<i64: 1, 256>}, {pipeline_mode = #tpu.pipeline_mode<synchronous>, transform_indices = @transform_7, window_bounds = array<i64: 1, 256>}, {transform_indices = @transform_8, window_bounds = array<i64: 1, 1>}]} {
    %cst = arith.constant 0.000000e+00 : bf16
    %0 = vector.broadcast %cst : bf16 to vector<4x1x256xbf16>
    %c0 = arith.constant 0 : index
    %c0_0 = arith.constant 0 : index
    %c0_1 = arith.constant 0 : index
    %1 = vector.load %arg10[%c0, %c0_0, %c0_1] : memref<4x18x256xbf16, #tpu.memory_space<vmem>>, vector<4x1x256xbf16>
    tpu.vector_store %arg10[%c0, %c0_0, %c0_1], %0 {strides = array<i32>} : memref<4x18x256xbf16, #tpu.memory_space<vmem>>, vector<4x1x256xbf16>,
    %c0_2 = arith.constant 0 : index
    %c17 = arith.constant 17 : index
    %c0_3 = arith.constant 0 : index
    %2 = vector.load %arg10[%c0_2, %c17, %c0_3] : memref<4x18x256xbf16, #tpu.memory_space<vmem>>, vector<4x1x256xbf16>
    tpu.vector_store %arg10[%c0_2, %c17, %c0_3], %0 {strides = array<i32>} : memref<4x18x256xbf16, #tpu.memory_space<vmem>>, vector<4x1x256xbf16>,
    %c0_4 = arith.constant 0 : index
    %c0_5 = arith.constant 0 : index
    %c0_6 = arith.constant 0 : index
    %3 = vector.load %arg11[%c0_4, %c0_5, %c0_6] : memref<4x18x256xbf16, #tpu.memory_space<vmem>>, vector<4x1x256xbf16>
    tpu.vector_store %arg11[%c0_4, %c0_5, %c0_6], %0 {strides = array<i32>} : memref<4x18x256xbf16, #tpu.memory_space<vmem>>, vector<4x1x256xbf16>,
    %c0_7 = arith.constant 0 : index
    %c17_8 = arith.constant 17 : index
    %c0_9 = arith.constant 0 : index
    %4 = vector.load %arg11[%c0_7, %c17_8, %c0_9] : memref<4x18x256xbf16, #tpu.memory_space<vmem>>, vector<4x1x256xbf16>
    tpu.vector_store %arg11[%c0_7, %c17_8, %c0_9], %0 {strides = array<i32>} : memref<4x18x256xbf16, #tpu.memory_space<vmem>>, vector<4x1x256xbf16>,
    %c0_10 = arith.constant 0 : index
    %c0_11 = arith.constant 0 : index
    %c0_12 = arith.constant 0 : index
    %5 = vector.load %arg1[%c0_10, %c0_11, %c0_12] : memref<2x16x64xf32, #tpu.memory_space<vmem>>, vector<2x16x64xf32>
    %6 = arith.truncf %5 : vector<2x16x64xf32> to vector<2x16x64xbf16>
    %c0_13 = arith.constant 0 : index
    %c1 = arith.constant 1 : index
    %c0_14 = arith.constant 0 : index
    %7 = vector.load %arg10[%c0_13, %c1, %c0_14] : memref<4x18x256xbf16, #tpu.memory_space<vmem>>, vector<2x16x64xbf16>
    tpu.vector_store %arg10[%c0_13, %c1, %c0_14], %6 {strides = array<i32>} : memref<4x18x256xbf16, #tpu.memory_space<vmem>>, vector<2x16x64xbf16>,
    %c0_15 = arith.constant 0 : index
    %c0_16 = arith.constant 0 : index
    %c0_17 = arith.constant 0 : index
    %8 = vector.load %arg2[%c0_15, %c0_16, %c0_17] : memref<2x16x64xf32, #tpu.memory_space<vmem>>, vector<2x16x64xf32>
    %9 = arith.truncf %8 : vector<2x16x64xf32> to vector<2x16x64xbf16>
    %c2 = arith.constant 2 : index
    %c1_18 = arith.constant 1 : index
    %c0_19 = arith.constant 0 : index
    %10 = vector.load %arg10[%c2, %c1_18, %c0_19] : memref<4x18x256xbf16, #tpu.memory_space<vmem>>, vector<2x16x64xbf16>
    tpu.vector_store %arg10[%c2, %c1_18, %c0_19], %9 {strides = array<i32>} : memref<4x18x256xbf16, #tpu.memory_space<vmem>>, vector<2x16x64xbf16>,
    %c0_20 = arith.constant 0 : index
    %c0_21 = arith.constant 0 : index
    %11 = vector.load %arg6[%c0_20, %c0_21] : memref<1x128xf32, #tpu.memory_space<vmem>>, vector<1x128xf32>
    %12 = vector.shape_cast %11 : vector<1x128xf32> to vector<1x128xf32>
    %13 = vector.broadcast %12 : vector<1x128xf32> to vector<64x128xf32>
    %c0_22 = arith.constant 0 : index
    %c0_23 = arith.constant 0 : index
    %c0_24 = arith.constant 0 : index
    %14 = vector.load %arg10[%c0_22, %c0_23, %c0_24] : memref<4x18x256xbf16, #tpu.memory_space<vmem>>, vector<4x16x64xbf16>
    %15 = vector.shape_cast %14 : vector<4x16x64xbf16> to vector<64x64xbf16>
    %c0_25 = arith.constant 0 : index
    %c0_26 = arith.constant 0 : index
    %c0_27 = arith.constant 0 : index
    %16 = vector.load %arg3[%c0_25, %c0_26, %c0_27] : memref<3x64x128xbf16, #tpu.memory_space<vmem>>, vector<1x64x128xbf16>
    %17 = vector.shape_cast %16 : vector<1x64x128xbf16> to vector<64x128xbf16>
    %cst_28 = arith.constant dense<0.000000e+00> : vector<64x128xf32>
    %18 = tpu.matmul %15, %17, %cst_28 {dimension_numbers = #tpu.dot_dimension_numbers<[1], [0], [0], [1], [0, 0, 1, 1], [], []>} : vector<64x64xbf16>, vector<64x128xbf16>, vector<64x128xf32> -> vector<64x128xf32>
    %19 = arith.addf %13, %18 : vector<64x128xf32>
    %c0_29 = arith.constant 0 : index
    %c1_30 = arith.constant 1 : index
    %c0_31 = arith.constant 0 : index
    %20 = vector.load %arg10[%c0_29, %c1_30, %c0_31] : memref<4x18x256xbf16, #tpu.memory_space<vmem>>, vector<4x16x64xbf16>
    %21 = vector.shape_cast %20 : vector<4x16x64xbf16> to vector<64x64xbf16>
    %c1_32 = arith.constant 1 : index
    %c0_33 = arith.constant 0 : index
    %c0_34 = arith.constant 0 : index
    %22 = vector.load %arg3[%c1_32, %c0_33, %c0_34] : memref<3x64x128xbf16, #tpu.memory_space<vmem>>, vector<1x64x128xbf16>
    %23 = vector.shape_cast %22 : vector<1x64x128xbf16> to vector<64x128xbf16>
    %cst_35 = arith.constant dense<0.000000e+00> : vector<64x128xf32>
    %24 = tpu.matmul %21, %23, %cst_35 {dimension_numbers = #tpu.dot_dimension_numbers<[1], [0], [0], [1], [0, 0, 1, 1], [], []>} : vector<64x64xbf16>, vector<64x128xbf16>, vector<64x128xf32> -> vector<64x128xf32>
    %25 = arith.addf %19, %24 : vector<64x128xf32>
    %c0_36 = arith.constant 0 : index
    %c2_37 = arith.constant 2 : index
    %c0_38 = arith.constant 0 : index
    %26 = vector.load %arg10[%c0_36, %c2_37, %c0_38] : memref<4x18x256xbf16, #tpu.memory_space<vmem>>, vector<4x16x64xbf16>
    %27 = vector.shape_cast %26 : vector<4x16x64xbf16> to vector<64x64xbf16>
    %c2_39 = arith.constant 2 : index
    %c0_40 = arith.constant 0 : index
    %c0_41 = arith.constant 0 : index
    %28 = vector.load %arg3[%c2_39, %c0_40, %c0_41] : memref<3x64x128xbf16, #tpu.memory_space<vmem>>, vector<1x64x128xbf16>
    %29 = vector.shape_cast %28 : vector<1x64x128xbf16> to vector<64x128xbf16>
    %cst_42 = arith.constant dense<0.000000e+00> : vector<64x128xf32>
    %30 = tpu.matmul %27, %29, %cst_42 {dimension_numbers = #tpu.dot_dimension_numbers<[1], [0], [0], [1], [0, 0, 1, 1], [], []>} : vector<64x64xbf16>, vector<64x128xbf16>, vector<64x128xf32> -> vector<64x128xf32>
    %31 = arith.addf %25, %30 : vector<64x128xf32>
    %cst_43 = arith.constant 0.000000e+00 : f32
    %32 = vector.broadcast %cst_43 : f32 to vector<64x128xf32>
    %33 = arith.maximumf %31, %32 : vector<64x128xf32>
    %34 = vector.extract_strided_slice %33 {offsets = [0, 0], sizes = [32, 128], strides = [1, 1]} : vector<64x128xf32> to vector<32x128xf32>
    %35 = vector.extract_strided_slice %33 {offsets = [32, 0], sizes = [32, 128], strides = [1, 1]} : vector<64x128xf32> to vector<32x128xf32>
    %36 = arith.subf %34, %35 : vector<32x128xf32>
    %37 = arith.mulf %36, %36 : vector<32x128xf32>
    %38 = vector.shape_cast %37 : vector<32x128xf32> to vector<1x32x128xf32>
    %cst_44 = arith.constant dense<0.000000e+00> : vector<1xf32>
    %39 = vector.multi_reduction <add>, %38, %cst_44 [1, 2] : vector<1x32x128xf32> to vector<1xf32>
    %40 = vector.shape_cast %39 : vector<1xf32> to vector<1x1x1xf32>
    %41 = vector.extract %40[0, 0, 0] : f32 from vector<1x1x1xf32>
    %cst_45 = arith.constant 2.44140625E-4 : f32
    %42 = arith.mulf %41, %cst_45 : f32
    %cst_46 = arith.constant 0.000000e+00 : f32
    %43 = arith.addf %cst_46, %42 : f32
    %44 = vector.shape_cast %33 : vector<64x128xf32> to vector<4x16x128xf32>
    %45 = arith.truncf %44 : vector<4x16x128xf32> to vector<4x16x128xbf16>
    %c0_47 = arith.constant 0 : index
    %c1_48 = arith.constant 1 : index
    %c0_49 = arith.constant 0 : index
    %46 = vector.load %arg11[%c0_47, %c1_48, %c0_49] : memref<4x18x256xbf16, #tpu.memory_space<vmem>>, vector<4x16x128xbf16>
    tpu.vector_store %arg11[%c0_47, %c1_48, %c0_49], %45 {strides = array<i32>} : memref<4x18x256xbf16, #tpu.memory_space<vmem>>, vector<4x16x128xbf16>,
    %c0_50 = arith.constant 0 : index
    %c0_51 = arith.constant 0 : index
    %47 = vector.load %arg7[%c0_50, %c0_51] : memref<1x256xf32, #tpu.memory_space<vmem>>, vector<1x256xf32>
    %48 = vector.shape_cast %47 : vector<1x256xf32> to vector<1x256xf32>
    %49 = vector.broadcast %48 : vector<1x256xf32> to vector<64x256xf32>
    %c0_52 = arith.constant 0 : index
    %c0_53 = arith.constant 0 : index
    %c0_54 = arith.constant 0 : index
    %50 = vector.load %arg11[%c0_52, %c0_53, %c0_54] : memref<4x18x256xbf16, #tpu.memory_space<vmem>>, vector<4x16x128xbf16>
    %51 = vector.shape_cast %50 : vector<4x16x128xbf16> to vector<64x128xbf16>
    %c0_55 = arith.constant 0 : index
    %c0_56 = arith.constant 0 : index
    %c0_57 = arith.constant 0 : index
    %52 = vector.load %arg4[%c0_55, %c0_56, %c0_57] : memref<3x128x256xbf16, #tpu.memory_space<vmem>>, vector<1x128x256xbf16>
    %53 = vector.shape_cast %52 : vector<1x128x256xbf16> to vector<128x256xbf16>
    %cst_58 = arith.constant dense<0.000000e+00> : vector<64x256xf32>
    %54 = tpu.matmul %51, %53, %cst_58 {dimension_numbers = #tpu.dot_dimension_numbers<[1], [0], [0], [1], [0, 0, 1, 1], [], []>} : vector<64x128xbf16>, vector<128x256xbf16>, vector<64x256xf32> -> vector<64x256xf32>
    %55 = arith.addf %49, %54 : vector<64x256xf32>
    %c0_59 = arith.constant 0 : index
    %c1_60 = arith.constant 1 : index
    %c0_61 = arith.constant 0 : index
    %56 = vector.load %arg11[%c0_59, %c1_60, %c0_61] : memref<4x18x256xbf16, #tpu.memory_space<vmem>>, vector<4x16x128xbf16>
    %57 = vector.shape_cast %56 : vector<4x16x128xbf16> to vector<64x128xbf16>
    %c1_62 = arith.constant 1 : index
    %c0_63 = arith.constant 0 : index
    %c0_64 = arith.constant 0 : index
    %58 = vector.load %arg4[%c1_62, %c0_63, %c0_64] : memref<3x128x256xbf16, #tpu.memory_space<vmem>>, vector<1x128x256xbf16>
    %59 = vector.shape_cast %58 : vector<1x128x256xbf16> to vector<128x256xbf16>
    %cst_65 = arith.constant dense<0.000000e+00> : vector<64x256xf32>
    %60 = tpu.matmul %57, %59, %cst_65 {dimension_numbers = #tpu.dot_dimension_numbers<[1], [0], [0], [1], [0, 0, 1, 1], [], []>} : vector<64x128xbf16>, vector<128x256xbf16>, vector<64x256xf32> -> vector<64x256xf32>
    %61 = arith.addf %55, %60 : vector<64x256xf32>
    %c0_66 = arith.constant 0 : index
    %c2_67 = arith.constant 2 : index
    %c0_68 = arith.constant 0 : index
    %62 = vector.load %arg11[%c0_66, %c2_67, %c0_68] : memref<4x18x256xbf16, #tpu.memory_space<vmem>>, vector<4x16x128xbf16>
    %63 = vector.shape_cast %62 : vector<4x16x128xbf16> to vector<64x128xbf16>
    %c2_69 = arith.constant 2 : index
    %c0_70 = arith.constant 0 : index
    %c0_71 = arith.constant 0 : index
    %64 = vector.load %arg4[%c2_69, %c0_70, %c0_71] : memref<3x128x256xbf16, #tpu.memory_space<vmem>>, vector<1x128x256xbf16>
    %65 = vector.shape_cast %64 : vector<1x128x256xbf16> to vector<128x256xbf16>
    %cst_72 = arith.constant dense<0.000000e+00> : vector<64x256xf32>
    %66 = tpu.matmul %63, %65, %cst_72 {dimension_numbers = #tpu.dot_dimension_numbers<[1], [0], [0], [1], [0, 0, 1, 1], [], []>} : vector<64x128xbf16>, vector<128x256xbf16>, vector<64x256xf32> -> vector<64x256xf32>
    %67 = arith.addf %61, %66 : vector<64x256xf32>
    %cst_73 = arith.constant 0.000000e+00 : f32
    %68 = vector.broadcast %cst_73 : f32 to vector<64x256xf32>
    %69 = arith.maximumf %67, %68 : vector<64x256xf32>
    %70 = vector.shape_cast %69 : vector<64x256xf32> to vector<4x16x256xf32>
    %71 = arith.truncf %70 : vector<4x16x256xf32> to vector<4x16x256xbf16>
    %c0_74 = arith.constant 0 : index
    %c1_75 = arith.constant 1 : index
    %c0_76 = arith.constant 0 : index
    %72 = vector.load %arg10[%c0_74, %c1_75, %c0_76] : memref<4x18x256xbf16, #tpu.memory_space<vmem>>, vector<4x16x256xbf16>
    tpu.vector_store %arg10[%c0_74, %c1_75, %c0_76], %71 {strides = array<i32>} : memref<4x18x256xbf16, #tpu.memory_space<vmem>>, vector<4x16x256xbf16>,
    %c0_77 = arith.constant 0 : index
    %c0_78 = arith.constant 0 : index
    %73 = vector.load %arg8[%c0_77, %c0_78] : memref<1x256xf32, #tpu.memory_space<vmem>>, vector<1x256xf32>
    %74 = vector.shape_cast %73 : vector<1x256xf32> to vector<1x256xf32>
    %75 = vector.broadcast %74 : vector<1x256xf32> to vector<64x256xf32>
    %c0_79 = arith.constant 0 : index
    %c0_80 = arith.constant 0 : index
    %c0_81 = arith.constant 0 : index
    %76 = vector.load %arg10[%c0_79, %c0_80, %c0_81] : memref<4x18x256xbf16, #tpu.memory_space<vmem>>, vector<4x16x256xbf16>
    %77 = vector.shape_cast %76 : vector<4x16x256xbf16> to vector<64x256xbf16>
    %c0_82 = arith.constant 0 : index
    %c0_83 = arith.constant 0 : index
    %c0_84 = arith.constant 0 : index
    %78 = vector.load %arg5[%c0_82, %c0_83, %c0_84] : memref<3x256x256xbf16, #tpu.memory_space<vmem>>, vector<1x256x256xbf16>
    %79 = vector.shape_cast %78 : vector<1x256x256xbf16> to vector<256x256xbf16>
    %cst_85 = arith.constant dense<0.000000e+00> : vector<64x256xf32>
    %80 = tpu.matmul %77, %79, %cst_85 {dimension_numbers = #tpu.dot_dimension_numbers<[1], [0], [0], [1], [0, 0, 1, 1], [], []>} : vector<64x256xbf16>, vector<256x256xbf16>, vector<64x256xf32> -> vector<64x256xf32>
    %81 = arith.addf %75, %80 : vector<64x256xf32>
    %c0_86 = arith.constant 0 : index
    %c1_87 = arith.constant 1 : index
    %c0_88 = arith.constant 0 : index
    %82 = vector.load %arg10[%c0_86, %c1_87, %c0_88] : memref<4x18x256xbf16, #tpu.memory_space<vmem>>, vector<4x16x256xbf16>
    %83 = vector.shape_cast %82 : vector<4x16x256xbf16> to vector<64x256xbf16>
    %c1_89 = arith.constant 1 : index
    %c0_90 = arith.constant 0 : index
    %c0_91 = arith.constant 0 : index
    %84 = vector.load %arg5[%c1_89, %c0_90, %c0_91] : memref<3x256x256xbf16, #tpu.memory_space<vmem>>, vector<1x256x256xbf16>
    %85 = vector.shape_cast %84 : vector<1x256x256xbf16> to vector<256x256xbf16>
    %cst_92 = arith.constant dense<0.000000e+00> : vector<64x256xf32>
    %86 = tpu.matmul %83, %85, %cst_92 {dimension_numbers = #tpu.dot_dimension_numbers<[1], [0], [0], [1], [0, 0, 1, 1], [], []>} : vector<64x256xbf16>, vector<256x256xbf16>, vector<64x256xf32> -> vector<64x256xf32>
    %87 = arith.addf %81, %86 : vector<64x256xf32>
    %c0_93 = arith.constant 0 : index
    %c2_94 = arith.constant 2 : index
    %c0_95 = arith.constant 0 : index
    %88 = vector.load %arg10[%c0_93, %c2_94, %c0_95] : memref<4x18x256xbf16, #tpu.memory_space<vmem>>, vector<4x16x256xbf16>
    %89 = vector.shape_cast %88 : vector<4x16x256xbf16> to vector<64x256xbf16>
    %c2_96 = arith.constant 2 : index
    %c0_97 = arith.constant 0 : index
    %c0_98 = arith.constant 0 : index
    %90 = vector.load %arg5[%c2_96, %c0_97, %c0_98] : memref<3x256x256xbf16, #tpu.memory_space<vmem>>, vector<1x256x256xbf16>
    %91 = vector.shape_cast %90 : vector<1x256x256xbf16> to vector<256x256xbf16>
    %cst_99 = arith.constant dense<0.000000e+00> : vector<64x256xf32>
    %92 = tpu.matmul %89, %91, %cst_99 {dimension_numbers = #tpu.dot_dimension_numbers<[1], [0], [0], [1], [0, 0, 1, 1], [], []>} : vector<64x256xbf16>, vector<256x256xbf16>, vector<64x256xf32> -> vector<64x256xf32>
    %93 = arith.addf %87, %92 : vector<64x256xf32>
    %cst_100 = arith.constant 0.000000e+00 : f32
    %94 = vector.broadcast %cst_100 : f32 to vector<64x256xf32>
    %95 = arith.maximumf %93, %94 : vector<64x256xf32>
    %96 = vector.extract_strided_slice %95 {offsets = [0, 0], sizes = [32, 256], strides = [1, 1]} : vector<64x256xf32> to vector<32x256xf32>
    %97 = vector.extract_strided_slice %95 {offsets = [32, 0], sizes = [32, 256], strides = [1, 1]} : vector<64x256xf32> to vector<32x256xf32>
    %98 = arith.subf %96, %97 : vector<32x256xf32>
    %99 = arith.mulf %98, %98 : vector<32x256xf32>
    %100 = vector.shape_cast %99 : vector<32x256xf32> to vector<1x32x256xf32>
    %cst_101 = arith.constant dense<0.000000e+00> : vector<1xf32>
    %101 = vector.multi_reduction <add>, %100, %cst_101 [1, 2] : vector<1x32x256xf32> to vector<1xf32>
    %102 = vector.shape_cast %101 : vector<1xf32> to vector<1x1x1xf32>
    %103 = vector.extract %102[0, 0, 0] : f32 from vector<1x1x1xf32>
    %cst_102 = arith.constant 1.22070313E-4 : f32
    %104 = arith.mulf %103, %cst_102 : f32
    %105 = arith.addf %43, %104 : f32
    %c0_103 = arith.constant 0 : index
    %c0_104 = arith.constant 0 : index
    %106 = memref.load %arg9[%c0_103, %c0_104] : memref<1x1xf32, #tpu.memory_space<smem>>
    memref.store %105, %arg9[%c0_103, %c0_104] : memref<1x1xf32, #tpu.memory_space<smem>>
    return
  }
  func.func @transform_0(%arg0: i32) -> (i32, i32, i32) {
    %c0_i32 = arith.constant 0 : i32
    %c0_i32_0 = arith.constant 0 : i32
    %c0_i32_1 = arith.constant 0 : i32
    return %arg0, %c0_i32, %c0_i32_0 : i32, i32, i32
  }
  func.func @transform_1(%arg0: i32) -> (i32, i32, i32) {
    %c0_i32 = arith.constant 0 : i32
    %c0_i32_0 = arith.constant 0 : i32
    %c0_i32_1 = arith.constant 0 : i32
    return %arg0, %c0_i32, %c0_i32_0 : i32, i32, i32
  }
  func.func @transform_2(%arg0: i32) -> (i32, i32, i32) {
    %c0_i32 = arith.constant 0 : i32
    %c0_i32_0 = arith.constant 0 : i32
    %c0_i32_1 = arith.constant 0 : i32
    %c0_i32_2 = arith.constant 0 : i32
    return %c0_i32, %c0_i32_0, %c0_i32_1 : i32, i32, i32
  }
  func.func @transform_3(%arg0: i32) -> (i32, i32, i32) {
    %c0_i32 = arith.constant 0 : i32
    %c0_i32_0 = arith.constant 0 : i32
    %c0_i32_1 = arith.constant 0 : i32
    %c0_i32_2 = arith.constant 0 : i32
    return %c0_i32, %c0_i32_0, %c0_i32_1 : i32, i32, i32
  }
  func.func @transform_4(%arg0: i32) -> (i32, i32, i32) {
    %c0_i32 = arith.constant 0 : i32
    %c0_i32_0 = arith.constant 0 : i32
    %c0_i32_1 = arith.constant 0 : i32
    %c0_i32_2 = arith.constant 0 : i32
    return %c0_i32, %c0_i32_0, %c0_i32_1 : i32, i32, i32
  }
  func.func @transform_5(%arg0: i32) -> (i32, i32) {
    %c0_i32 = arith.constant 0 : i32
    %c0_i32_0 = arith.constant 0 : i32
    %c0_i32_1 = arith.constant 0 : i32
    return %c0_i32, %c0_i32_0 : i32, i32
  }
  func.func @transform_6(%arg0: i32) -> (i32, i32) {
    %c0_i32 = arith.constant 0 : i32
    %c0_i32_0 = arith.constant 0 : i32
    %c0_i32_1 = arith.constant 0 : i32
    return %c0_i32, %c0_i32_0 : i32, i32
  }
  func.func @transform_7(%arg0: i32) -> (i32, i32) {
    %c0_i32 = arith.constant 0 : i32
    %c0_i32_0 = arith.constant 0 : i32
    %c0_i32_1 = arith.constant 0 : i32
    return %c0_i32, %c0_i32_0 : i32, i32
  }
  func.func @transform_8(%arg0: i32) -> (i32, i32) {
    %c0_i32 = arith.constant 0 : i32
    %c0_i32_0 = arith.constant 0 : i32
    return %arg0, %c0_i32 : i32, i32
  }
}

</mosaic_0001>

<llo_original>
// kernel: _lambda_.1
$region0: #{_lambda_.1}
  #allocation0 [shape = 'u32[]', space=smem, size = 0x4, offset = 0x4, fixed_abs, tag = 'smem constant byte address 0x4 - core index']
  #allocation1 [shape = 'u32[144,128]{1,0:T(1,128)}', space=vmem, size = 0x12000, scoped, tag = 'internal scratch']
  #allocation2 [shape = 'bf16[4,18,256]{2,1,0:T(8,128)(2,1)}', space=vmem, size = 0xc000, scoped, tag = 'scratch operand']
  #allocation3 [shape = 'bf16[4,18,256]{2,1,0:T(8,128)(2,1)}', space=vmem, size = 0xc000, scoped, tag = 'scratch operand']
  %s0 = inlined_call_operand.vmem [shape: f32[2,16,64], index: 0, kind: input, shape index: {}]
  %s1 = inlined_call_operand.vmem [shape: f32[2,16,64], index: 1, kind: input, shape index: {}]
  %s2 = inlined_call_operand.vmem [shape: bf16[3,64,128], index: 2, kind: input, shape index: {}]
  %s3 = inlined_call_operand.vmem [shape: bf16[3,128,256], index: 3, kind: input, shape index: {}]
  %s4 = inlined_call_operand.vmem [shape: bf16[3,256,256], index: 4, kind: input, shape index: {}]
  %s5 = inlined_call_operand.vmem [shape: f32[1,128], index: 5, kind: input, shape index: {}]
  %s6 = inlined_call_operand.vmem [shape: f32[1,256], index: 6, kind: input, shape index: {}]
  %s7 = inlined_call_operand.vmem [shape: f32[1,256], index: 7, kind: input, shape index: {}]
  %s8 = inlined_call_operand.hbm [shape: f32[1,1], index: 8, kind: output, shape index: {}]
  %s9 = sld [smem:[#allocation0]]
  $region42: #{_lambda_.1} parent=0
    _
  %s11 = ssub.s32 1, %s9
  %s12 = scalar_select 0, %s11, %s9
  $region1: #{_lambda_.1} parent=0
    #allocation4 [shape = 'u8[512]{0}', space=smem, size = 0x200, scoped, tag = 'output window, operand 0, single buffered']
    #allocation5 [shape = 's32[1]{0}', space=sflag, size = 0x4, scoped, tag = 'scoped memory for _lambda_.1']
    %13 = vsyncpa [#allocation5], 0
    // Predicated region
    $region2: #{_lambda_.1} parent=1 // pred_check
      _
    $region3: #{_lambda_.1} parent=1 // pred_check_branch
      %15 = sbr.rel (0) target = $region5
    $region4: #{_lambda_.1} parent=1 // pred_region
      _
    $region5: #{_lambda_.1} parent=1 // pred_fallthru
      _
    // Predicated region
    $region6: #{_lambda_.1} parent=1 // pred_check
      _
    $region7: #{_lambda_.1} parent=1 // pred_check_branch
      %17 = sbr.rel (0) target = $region9
    $region8: #{_lambda_.1} parent=1 // pred_region
      _
    $region9: #{_lambda_.1} parent=1 // pred_fallthru
      _
    // Predicated region
    $region10: #{_lambda_.1} parent=1 // pred_check
      _
    $region11: #{_lambda_.1} parent=1 // pred_check_branch
      %19 = sbr.rel (0) target = $region13
    $region12: #{_lambda_.1} parent=1 // pred_region
      _
    $region13: #{_lambda_.1} parent=1 // pred_fallthru
      _
    // Predicated region
    $region14: #{_lambda_.1} parent=1 // pred_check
      _
    $region15: #{_lambda_.1} parent=1 // pred_check_branch
      %21 = sbr.rel (0) target = $region17
    $region16: #{_lambda_.1} parent=1 // pred_region
      _
    $region17: #{_lambda_.1} parent=1 // pred_fallthru
      _
    // Predicated region
    $region18: #{_lambda_.1} parent=1 // pred_check
      _
    $region19: #{_lambda_.1} parent=1 // pred_check_branch
      %23 = sbr.rel (0) target = $region21
    $region20: #{_lambda_.1} parent=1 // pred_region
      _
    $region21: #{_lambda_.1} parent=1 // pred_fallthru
      _
    // Predicated region
    $region22: #{_lambda_.1} parent=1 // pred_check
      _
    $region23: #{_lambda_.1} parent=1 // pred_check_branch
      %25 = sbr.rel (0) target = $region25
    $region24: #{_lambda_.1} parent=1 // pred_region
      _
    $region25: #{_lambda_.1} parent=1 // pred_fallthru
      _
    // Predicated region
    $region26: #{_lambda_.1} parent=1 // pred_check
      _
    $region27: #{_lambda_.1} parent=1 // pred_check_branch
      %27 = sbr.rel (0) target = $region29
    $region28: #{_lambda_.1} parent=1 // pred_region
      _
    $region29: #{_lambda_.1} parent=1 // pred_fallthru
      _
    // Predicated region
    $region30: #{_lambda_.1} parent=1 // pred_check
      _
    $region31: #{_lambda_.1} parent=1 // pred_check_branch
      %29 = sbr.rel (0) target = $region33
    $region32: #{_lambda_.1} parent=1 // pred_region
      _
    $region33: #{_lambda_.1} parent=1 // pred_fallthru
      _
    %vm31 = vcmask 1040384
    %vm32 = vsmask.f32 256
    %vm33 = vmand %vm31, %vm32
    %vm34 = vcmask 1044484
    %vm35 = vsmask.f32 4352
    %vm36 = vmand %vm34, %vm35
    %vm37 = vmor %vm36, %vm33
    %v38 = vld [vmem:[#allocation2] sm:$0x11]
    %v39 = vsel %vm37, 0, %v38
    %40 = vst [vmem:[#allocation2] sm:$0x11] %v39
    %v41 = vld [vmem:[#allocation2 + $0x18] sm:$0x11]
    %v42 = vsel %vm37, 0, %v41
    %43 = vst [vmem:[#allocation2 + $0x18] sm:$0x11] %v42
    %v44 = vld [vmem:[#allocation2 + $0x30] sm:$0x11]
    %v45 = vsel %vm37, 0, %v44
    %46 = vst [vmem:[#allocation2 + $0x30] sm:$0x11] %v45
    %v47 = vld [vmem:[#allocation2 + $0x48] sm:$0x11]
    %v48 = vsel %vm37, 0, %v47
    %49 = vst [vmem:[#allocation2 + $0x48] sm:$0x11] %v48
    %vm50 = vsmask.f32 7938
    %vm51 = vmand %vm31, %vm50
    %vm52 = vsmask.f32 7954
    %vm53 = vmand %vm34, %vm52
    %vm54 = vmor %vm53, %vm51
    %v55 = vld [vmem:[#allocation2 + $0x10] sm:$0x11]
    %v56 = vsel %vm54, 0, %v55
    %57 = vst [vmem:[#allocation2 + $0x10] sm:$0x11] %v56
    %v58 = vld [vmem:[#allocation2 + $0x28] sm:$0x11]
    %v59 = vsel %vm54, 0, %v58
    %60 = vst [vmem:[#allocation2 + $0x28] sm:$0x11] %v59
    %v61 = vld [vmem:[#allocation2 + $0x40] sm:$0x11]
    %v62 = vsel %vm54, 0, %v61
    %63 = vst [vmem:[#allocation2 + $0x40] sm:$0x11] %v62
    %v64 = vld [vmem:[#allocation2 + $0x58] sm:$0x11]
    %v65 = vsel %vm54, 0, %v64
    %66 = vst [vmem:[#allocation2 + $0x58] sm:$0x11] %v65
    %v67 = vld [vmem:[#allocation3] sm:$0x11]
    %v68 = vsel %vm37, 0, %v67
    %69 = vst [vmem:[#allocation3] sm:$0x11] %v68
    %v70 = vld [vmem:[#allocation3 + $0x18] sm:$0x11]
    %v71 = vsel %vm37, 0, %v70
    %72 = vst [vmem:[#allocation3 + $0x18] sm:$0x11] %v71
    %v73 = vld [vmem:[#allocation3 + $0x30] sm:$0x11]
    %v74 = vsel %vm37, 0, %v73
    %75 = vst [vmem:[#allocation3 + $0x30] sm:$0x11] %v74
    %v76 = vld [vmem:[#allocation3 + $0x48] sm:$0x11]
    %v77 = vsel %vm37, 0, %v76
    %78 = vst [vmem:[#allocation3 + $0x48] sm:$0x11] %v77
    %v79 = vld [vmem:[#allocation3 + $0x10] sm:$0x11]
    %v80 = vsel %vm54, 0, %v79
    %81 = vst [vmem:[#allocation3 + $0x10] sm:$0x11] %v80
    %v82 = vld [vmem:[#allocation3 + $0x28] sm:$0x11]
    %v83 = vsel %vm54, 0, %v82
    %84 = vst [vmem:[#allocation3 + $0x28] sm:$0x11] %v83
    %v85 = vld [vmem:[#allocation3 + $0x40] sm:$0x11]
    %v86 = vsel %vm54, 0, %v85
    %87 = vst [vmem:[#allocation3 + $0x40] sm:$0x11] %v86
    %v88 = vld [vmem:[#allocation3 + $0x58] sm:$0x11]
    %v89 = vsel %vm54, 0, %v88
    %90 = vst [vmem:[#allocation3 + $0x58] sm:$0x11] %v89
    %v91 = vld [vmem:[%s0] sm:$0xff]
    %v92 = vld [vmem:[%s0 + $0x8] sm:$0xff]
    %v93 = vld [vmem:[%s0 + $0x10] sm:$0xff]
    %v94 = vld [vmem:[%s0 + $0x18] sm:$0xff]
    %v95 = vpack.c.bf16 %v92, %v91
    %v96 = vpack.c.bf16 %v94, %v93
    %v99 = vunpack.c.l.b16 %v95
    %v100 = vunpack.c.h.b16 %v95
    %v101 = vunpack.c.l.b16 %v96
    %v102 = vunpack.c.h.b16 %v96
    %v103 = vpack.c.b16 %v99, %v99
    %v104 = vpack.c.b16 %v100, %v100
    %v105 = vpack.c.b16 %v101, %v101
    %v106 = vpack.c.b16 %v102, %v102
    %vm107 = vsmask.f32 4368
    %vm108 = vmor %vm32, %vm107
    %v110 = vshrl.u32 %v103, 16
    %v112 = vrot.slane %v110, 7
    %v113 = vshll.u32 %v103, 16
    %v115 = vor.u32 %v112, %v113
    %v116 = vrot.slane %v112, 4
    %v118 = vshrl.u32 %v104, 16
    %v120 = vrot.slane %v118, 7
    %v121 = vshll.u32 %v104, 16
    %v123 = vor.u32 %v120, %v121
    %v124 = vsel %vm108, %v116, %v123
    %v125 = vrot.slane %v120, 4
    %v127 = vshrl.u32 %v105, 16
    %v129 = vrot.slane %v127, 7
    %v130 = vshll.u32 %v105, 16
    %v132 = vor.u32 %v129, %v130
    %v133 = vrot.slane %v129, 4
    %v135 = vshrl.u32 %v106, 16
    %v137 = vrot.slane %v135, 7
    %v138 = vshll.u32 %v106, 16
    %v140 = vor.u32 %v137, %v138
    %v141 = vsel %vm108, %v133, %v140
    %v142 = vrot.slane %v137, 4
    %vm149 = vcmask 519168
    %vm150 = vmand %vm149, %vm50
    %v151 = vld [vmem:[#allocation2] sm:$0xf]
    %v152 = vsel %vm150, %v115, %v151
    %153 = vst [vmem:[#allocation2] sm:$0xf] %v152
    %vm154 = vcmask 519168
    %155 = vst.msk [vmem:[#allocation2 + $0x8] sm:$0xf] %vm154, %v124
    %vm156 = vcmask 516096
    %vm157 = vmand %vm156, %vm32
    %v158 = vld [vmem:[#allocation2 + $0x10] sm:$0x1]
    %v159 = vsel %vm157, %v125, %v158
    %160 = vst [vmem:[#allocation2 + $0x10] sm:$0x1] %v159
    %v161 = vld [vmem:[#allocation2 + $0x18] sm:$0xf]
    %v162 = vsel %vm150, %v132, %v161
    %163 = vst [vmem:[#allocation2 + $0x18] sm:$0xf] %v162
    %164 = vst.msk [vmem:[#allocation2 + $0x20] sm:$0xf] %vm154, %v141
    %v165 = vld [vmem:[#allocation2 + $0x28] sm:$0x1]
    %v166 = vsel %vm157, %v142, %v165
    %167 = vst [vmem:[#allocation2 + $0x28] sm:$0x1] %v166
    %v168 = vld [vmem:[%s1] sm:$0xff]
    %v169 = vld [vmem:[%s1 + $0x8] sm:$0xff]
    %v170 = vld [vmem:[%s1 + $0x10] sm:$0xff]
    %v171 = vld [vmem:[%s1 + $0x18] sm:$0xff]
    %v172 = vpack.c.bf16 %v169, %v168
    %v173 = vpack.c.bf16 %v171, %v170
    %v176 = vunpack.c.l.b16 %v172
    %v177 = vunpack.c.h.b16 %v172
    %v178 = vunpack.c.l.b16 %v173
    %v179 = vunpack.c.h.b16 %v173
    %v180 = vpack.c.b16 %v176, %v176
    %v181 = vpack.c.b16 %v177, %v177
    %v182 = vpack.c.b16 %v178, %v178
    %v183 = vpack.c.b16 %v179, %v179
    %v185 = vshrl.u32 %v180, 16
    %v187 = vrot.slane %v185, 7
    %v188 = vshll.u32 %v180, 16
    %v190 = vor.u32 %v187, %v188
    %v191 = vrot.slane %v187, 4
    %v193 = vshrl.u32 %v181, 16
    %v195 = vrot.slane %v193, 7
    %v196 = vshll.u32 %v181, 16
    %v198 = vor.u32 %v195, %v196
    %v199 = vsel %vm108, %v191, %v198
    %v200 = vrot.slane %v195, 4
    %v202 = vshrl.u32 %v182, 16
    %v204 = vrot.slane %v202, 7
    %v205 = vshll.u32 %v182, 16
    %v207 = vor.u32 %v204, %v205
    %v208 = vrot.slane %v204, 4
    %v210 = vshrl.u32 %v183, 16
    %v212 = vrot.slane %v210, 7
    %v213 = vshll.u32 %v183, 16
    %v215 = vor.u32 %v212, %v213
    %v216 = vsel %vm108, %v208, %v215
    %v217 = vrot.slane %v212, 4
    %s224 = scalar_lea.vmem [#allocation2], 48
    %v225 = vld [vmem:[%s224] sm:$0xf]
    %v226 = vsel %vm150, %v190, %v225
    %227 = vst [vmem:[%s224] sm:$0xf] %v226
    %228 = vst.msk [vmem:[%s224 + $0x8] sm:$0xf] %vm154, %v199
    %v229 = vld [vmem:[%s224 + $0x10] sm:$0x1]
    %v230 = vsel %vm157, %v200, %v229
    %231 = vst [vmem:[%s224 + $0x10] sm:$0x1] %v230
    %v232 = vld [vmem:[%s224 + $0x18] sm:$0xf]
    %v233 = vsel %vm150, %v207, %v232
    %234 = vst [vmem:[%s224 + $0x18] sm:$0xf] %v233
    %235 = vst.msk [vmem:[%s224 + $0x20] sm:$0xf] %vm154, %v216
    %v236 = vld [vmem:[%s224 + $0x28] sm:$0x1]
    %v237 = vsel %vm157, %v217, %v236
    %238 = vst [vmem:[%s224 + $0x28] sm:$0x1] %v237
    %v239 = vld [vmem:[%s5] sm:$0x1]
    %v241 = vlaneseq
    %v242 = vshrl.u32 %v241, 7
    %v243 = vsub.s32 0, %v242
    %v244 = vrot.slane %v239, %v243
    %v246 = vld [vmem:[#allocation2] sm:$0xf]
    %v247 = vld [vmem:[#allocation2 + $0x8] sm:$0xf]
    %v248 = vld [vmem:[#allocation2 + $0x18] sm:$0xf]
    %v249 = vld [vmem:[#allocation2 + $0x20] sm:$0xf]
    %v250 = vld [vmem:[#allocation2 + $0x30] sm:$0xf]
    %v251 = vld [vmem:[#allocation2 + $0x38] sm:$0xf]
    %v252 = vld [vmem:[#allocation2 + $0x48] sm:$0xf]
    %v253 = vld [vmem:[#allocation2 + $0x50] sm:$0xf]
    %v254 = vld [vmem:[%s2] sm:$0xf]
    %v255 = vld [vmem:[%s2 + $0x4] sm:$0xf]
    %v256 = vld [vmem:[%s2 + $0x8] sm:$0xf]
    %v257 = vld [vmem:[%s2 + $0xc] sm:$0xf]
    %v258 = vld [vmem:[%s2 + $0x10] sm:$0xf]
    %v259 = vld [vmem:[%s2 + $0x14] sm:$0xf]
    %v260 = vld [vmem:[%s2 + $0x18] sm:$0xf]
    %v261 = vld [vmem:[%s2 + $0x1c] sm:$0xf]
    %v270 = vunpack.c.l.b16 %v246
    %v271 = vunpack.c.l.b16 %v247
    %v272 = vunpack.c.l.b16 %v248
    %v273 = vunpack.c.l.b16 %v249
    %v274 = vunpack.c.l.b16 %v250
    %v275 = vunpack.c.l.b16 %v251
    %v276 = vunpack.c.l.b16 %v252
    %v277 = vunpack.c.l.b16 %v253
    %v278 = vpack.c.b16 %v271, %v270
    %v279 = vpack.c.b16 %v273, %v272
    %v280 = vpack.c.b16 %v275, %v274
    %v281 = vpack.c.b16 %v277, %v276
    %v290 = vunpack.c.l.b16 %v254
    %v291 = vunpack.c.l.b16 %v255
    %v292 = vunpack.c.l.b16 %v256
    %v293 = vunpack.c.l.b16 %v257
    %v294 = vunpack.c.l.b16 %v258
    %v295 = vunpack.c.l.b16 %v259
    %v296 = vunpack.c.l.b16 %v260
    %v297 = vunpack.c.l.b16 %v261
    %v298 = vpack.c.b16 %v291, %v290
    %v299 = vpack.c.b16 %v293, %v292
    %v300 = vpack.c.b16 %v295, %v294
    %v301 = vpack.c.b16 %v297, %v296
    %vm306 = vcmask 523264
    %v308 = vsel %vm306, %v278, 0
    %v311 = vsel %vm306, %v279, 0
    %v314 = vsel %vm306, %v280, 0
    %v317 = vsel %vm306, %v281, 0
    %319 = vmatprep.subr.bf16.mxu0 0
    %320 = vmatpush1.bf16.msra.mxu0 %v298
    %321 = vmatprep.subr.bf16.mxu0 0
    %322 = vmatpush1.bf16.msra.mxu0 %v299
    %323 = vmatprep.subr.bf16.mxu0 0
    %324 = vmatpush1.bf16.msra.mxu0 %v300
    %325 = vmatprep.subr.bf16.mxu0 0
    %326 = vmatpush1.bf16.msra.mxu0 %v301
    %327 = vmatprep.subr.bf16.mxu0 0
    %328 = vmatpush1.bf16.msra.mxu0 0
    %329 = vmatprep.subr.bf16.mxu0 0
    %330 = vmatpush1.bf16.msra.mxu0 0
    %331 = vmatprep.subr.bf16.mxu0 0
    %332 = vmatpush1.bf16.msra.mxu0 0
    %333 = vmatprep.subr.bf16.mxu0 0
    %334 = vmatpush1.bf16.msra.mxu0 0
    %335 = vmatprep.subr.bf16.mxu0 0
    %336 = vmatpush1.bf16.msra.mxu0 0
    %337 = vmatprep.subr.bf16.mxu0 0
    %338 = vmatpush1.bf16.msra.mxu0 0
    %339 = vmatprep.subr.bf16.mxu0 0
    %340 = vmatpush1.bf16.msra.mxu0 0
    %341 = vmatprep.subr.bf16.mxu0 0
    %342 = vmatpush1.bf16.msra.mxu0 0
    %343 = vmatprep.subr.bf16.mxu0 0
    %344 = vmatpush1.bf16.msra.mxu0 0
    %345 = vmatprep.subr.bf16.mxu0 0
    %346 = vmatpush1.bf16.msra.mxu0 0
    %347 = vmatprep.subr.bf16.mxu0 0
    %348 = vmatpush1.bf16.msra.mxu0 0
    %349 = vmatprep.subr.bf16.mxu0 0
    %350 = vmatpush1.bf16.msra.mxu0 0
    %351 = vmatprep.mubr.bf16.mxu0 0
    %352 = vmatmul.mubr.bf16.gmra.mrb[0].mxu0 %v308
    %v353 = vpop.f32.mrb[0].mxu0
    %v354 = vadd.f32 0.0, %v353
    %v355 = vpop.f32.mrb[0].mxu0
    %v356 = vpop.f32.mrb[0].mxu0
    %v357 = vadd.f32 0.0, %v356
    %v358 = vpop.f32.mrb[0].mxu0
    %359 = vmatprep.mubr.bf16.mxu0 0
    %360 = vmatmul.mubr.bf16.gmra.mrb[0].mxu0 %v311
    %v361 = vpop.f32.mrb[0].mxu0
    %v362 = vadd.f32 0.0, %v361
    %v363 = vpop.f32.mrb[0].mxu0
    %v364 = vpop.f32.mrb[0].mxu0
    %v365 = vadd.f32 0.0, %v364
    %v366 = vpop.f32.mrb[0].mxu0
    %367 = vmatprep.mubr.bf16.mxu0 0
    %368 = vmatmul.mubr.bf16.gmra.mrb[0].mxu0 %v314
    %v369 = vpop.f32.mrb[0].mxu0
    %v370 = vadd.f32 0.0, %v369
    %v371 = vpop.f32.mrb[0].mxu0
    %v372 = vpop.f32.mrb[0].mxu0
    %v373 = vadd.f32 0.0, %v372
    %v374 = vpop.f32.mrb[0].mxu0
    %375 = vmatprep.mubr.bf16.mxu0 0
    %376 = vmatmul.mubr.bf16.gmra.mrb[0].mxu0 %v317
    %v377 = vpop.f32.mrb[0].mxu0
    %v378 = vadd.f32 0.0, %v377
    %v379 = vpop.f32.mrb[0].mxu0
    %v380 = vpop.f32.mrb[0].mxu0
    %v381 = vadd.f32 0.0, %v380
    %v382 = vpop.f32.mrb[0].mxu0
    %383 = vdwg.mxu0
    %v384 = vadd.f32 %v244, %v354
    %v385 = vadd.f32 %v244, %v357
    %v386 = vadd.f32 %v244, %v362
    %v387 = vadd.f32 %v244, %v365
    %v388 = vadd.f32 %v244, %v370
    %v389 = vadd.f32 %v244, %v373
    %v390 = vadd.f32 %v244, %v378
    %v391 = vadd.f32 %v244, %v381
    %v392 = vld [vmem:[#allocation2] sm:$0xf]
    %v393 = vld [vmem:[#allocation2 + $0x8] sm:$0xf]
    %v394 = vld [vmem:[#allocation2 + $0x10] sm:$0x1]
    %v395 = vld [vmem:[#allocation2 + $0x18] sm:$0xf]
    %v396 = vld [vmem:[#allocation2 + $0x20] sm:$0xf]
    %v397 = vld [vmem:[#allocation2 + $0x28] sm:$0x1]
    %v398 = vld [vmem:[#allocation2 + $0x30] sm:$0xf]
    %v399 = vld [vmem:[#allocation2 + $0x38] sm:$0xf]
    %v400 = vld [vmem:[#allocation2 + $0x40] sm:$0x1]
    %v401 = vld [vmem:[#allocation2 + $0x48] sm:$0xf]
    %v402 = vld [vmem:[#allocation2 + $0x50] sm:$0xf]
    %v403 = vld [vmem:[#allocation2 + $0x58] sm:$0x1]
    %vm404 = vsmask.f32 3328
    %vm405 = vsmask.f32 7440
    %vm406 = vmor %vm404, %vm405
    %v408 = vshrl.u32 %v392, 16
    %v410 = vrot.slane %v408, 4
    %v411 = vshll.u32 %v392, 16
    %v413 = vrot.slane %v411, 5
    %v414 = vor.u32 %v410, %v413
    %v415 = vrot.slane %v414, 4
    %v417 = vshll.u32 %v393, 16
    %v419 = vrot.slane %v417, 5
    %v420 = vsel %vm406, %v415, %v419
    %v421 = vshrl.u32 %v393, 16
    %v423 = vrot.slane %v421, 4
    %v424 = vor.u32 %v423, %v419
    %v425 = vrot.slane %v424, 4
    %v427 = vshll.u32 %v394, 16
    %v429 = vrot.slane %v427, 5
    %v430 = vsel %vm406, %v425, %v429
    %v432 = vshrl.u32 %v395, 16
    %v434 = vrot.slane %v432, 4
    %v435 = vshll.u32 %v395, 16
    %v437 = vrot.slane %v435, 5
    %v438 = vor.u32 %v434, %v437
    %v439 = vrot.slane %v438, 4
    %v441 = vshll.u32 %v396, 16
    %v443 = vrot.slane %v441, 5
    %v444 = vsel %vm406, %v439, %v443
    %v445 = vshrl.u32 %v396, 16
    %v447 = vrot.slane %v445, 4
    %v448 = vor.u32 %v447, %v443
    %v449 = vrot.slane %v448, 4
    %v451 = vshll.u32 %v397, 16
    %v453 = vrot.slane %v451, 5
    %v454 = vsel %vm406, %v449, %v453
    %v456 = vshrl.u32 %v398, 16
    %v458 = vrot.slane %v456, 4
    %v459 = vshll.u32 %v398, 16
    %v461 = vrot.slane %v459, 5
    %v462 = vor.u32 %v458, %v461
    %v463 = vrot.slane %v462, 4
    %v465 = vshll.u32 %v399, 16
    %v467 = vrot.slane %v465, 5
    %v468 = vsel %vm406, %v463, %v467
    %v469 = vshrl.u32 %v399, 16
    %v471 = vrot.slane %v469, 4
    %v472 = vor.u32 %v471, %v467
    %v473 = vrot.slane %v472, 4
    %v475 = vshll.u32 %v400, 16
    %v477 = vrot.slane %v475, 5
    %v478 = vsel %vm406, %v473, %v477
    %v480 = vshrl.u32 %v401, 16
    %v482 = vrot.slane %v480, 4
    %v483 = vshll.u32 %v401, 16
    %v485 = vrot.slane %v483, 5
    %v486 = vor.u32 %v482, %v485
    %v487 = vrot.slane %v486, 4
    %v489 = vshll.u32 %v402, 16
    %v491 = vrot.slane %v489, 5
    %v492 = vsel %vm406, %v487, %v491
    %v493 = vshrl.u32 %v402, 16
    %v495 = vrot.slane %v493, 4
    %v496 = vor.u32 %v495, %v491
    %v497 = vrot.slane %v496, 4
    %v499 = vshll.u32 %v403, 16
    %v501 = vrot.slane %v499, 5
    %v502 = vsel %vm406, %v497, %v501
    %s503 = scalar_lea.vmem %s2, 32
    %v504 = vld [vmem:[%s503] sm:$0xf]
    %v505 = vld [vmem:[%s503 + $0x4] sm:$0xf]
    %v506 = vld [vmem:[%s503 + $0x8] sm:$0xf]
    %v507 = vld [vmem:[%s503 + $0xc] sm:$0xf]
    %v508 = vld [vmem:[%s503 + $0x10] sm:$0xf]
    %v509 = vld [vmem:[%s503 + $0x14] sm:$0xf]
    %v510 = vld [vmem:[%s503 + $0x18] sm:$0xf]
    %v511 = vld [vmem:[%s503 + $0x1c] sm:$0xf]
    %v512 = vunpack.c.l.b16 %v420
    %v513 = vunpack.c.l.b16 %v430
    %v514 = vunpack.c.l.b16 %v444
    %v515 = vunpack.c.l.b16 %v454
    %v516 = vunpack.c.l.b16 %v468
    %v517 = vunpack.c.l.b16 %v478
    %v518 = vunpack.c.l.b16 %v492
    %v519 = vunpack.c.l.b16 %v502
    %v520 = vpack.c.b16 %v513, %v512
    %v521 = vpack.c.b16 %v515, %v514
    %v522 = vpack.c.b16 %v517, %v516
    %v523 = vpack.c.b16 %v519, %v518
    %v532 = vunpack.c.l.b16 %v504
    %v533 = vunpack.c.l.b16 %v505
    %v534 = vunpack.c.l.b16 %v506
    %v535 = vunpack.c.l.b16 %v507
    %v536 = vunpack.c.l.b16 %v508
    %v537 = vunpack.c.l.b16 %v509
    %v538 = vunpack.c.l.b16 %v510
    %v539 = vunpack.c.l.b16 %v511
    %v540 = vpack.c.b16 %v533, %v532
    %v541 = vpack.c.b16 %v535, %v534
    %v542 = vpack.c.b16 %v537, %v536
    %v543 = vpack.c.b16 %v539, %v538
    %v549 = vsel %vm306, %v520, 0
    %v552 = vsel %vm306, %v521, 0
    %v555 = vsel %vm306, %v522, 0
    %v558 = vsel %vm306, %v523, 0
    %560 = vmatprep.subr.bf16.mxu0 0
    %561 = vmatpush1.bf16.msra.mxu0 %v540
    %562 = vmatprep.subr.bf16.mxu0 0
    %563 = vmatpush1.bf16.msra.mxu0 %v541
    %564 = vmatprep.subr.bf16.mxu0 0
    %565 = vmatpush1.bf16.msra.mxu0 %v542
    %566 = vmatprep.subr.bf16.mxu0 0
    %567 = vmatpush1.bf16.msra.mxu0 %v543
    %568 = vmatprep.subr.bf16.mxu0 0
    %569 = vmatpush1.bf16.msra.mxu0 0
    %570 = vmatprep.subr.bf16.mxu0 0
    %571 = vmatpush1.bf16.msra.mxu0 0
    %572 = vmatprep.subr.bf16.mxu0 0
    %573 = vmatpush1.bf16.msra.mxu0 0
    %574 = vmatprep.subr.bf16.mxu0 0
    %575 = vmatpush1.bf16.msra.mxu0 0
    %576 = vmatprep.subr.bf16.mxu0 0
    %577 = vmatpush1.bf16.msra.mxu0 0
    %578 = vmatprep.subr.bf16.mxu0 0
    %579 = vmatpush1.bf16.msra.mxu0 0
    %580 = vmatprep.subr.bf16.mxu0 0
    %581 = vmatpush1.bf16.msra.mxu0 0
    %582 = vmatprep.subr.bf16.mxu0 0
    %583 = vmatpush1.bf16.msra.mxu0 0
    %584 = vmatprep.subr.bf16.mxu0 0
    %585 = vmatpush1.bf16.msra.mxu0 0
    %586 = vmatprep.subr.bf16.mxu0 0
    %587 = vmatpush1.bf16.msra.mxu0 0
    %588 = vmatprep.subr.bf16.mxu0 0
    %589 = vmatpush1.bf16.msra.mxu0 0
    %590 = vmatprep.subr.bf16.mxu0 0
    %591 = vmatpush1.bf16.msra.mxu0 0
    %592 = vmatprep.mubr.bf16.mxu0 0
    %593 = vmatmul.mubr.bf16.gmra.mrb[0].mxu0 %v549
    %v594 = vpop.f32.mrb[0].mxu0
    %v595 = vadd.f32 0.0, %v594
    %v596 = vpop.f32.mrb[0].mxu0
    %v597 = vpop.f32.mrb[0].mxu0
    %v598 = vadd.f32 0.0, %v597
    %v599 = vpop.f32.mrb[0].mxu0
    %600 = vmatprep.mubr.bf16.mxu0 0
    %601 = vmatmul.mubr.bf16.gmra.mrb[0].mxu0 %v552
    %v602 = vpop.f32.mrb[0].mxu0
    %v603 = vadd.f32 0.0, %v602
    %v604 = vpop.f32.mrb[0].mxu0
    %v605 = vpop.f32.mrb[0].mxu0
    %v606 = vadd.f32 0.0, %v605
    %v607 = vpop.f32.mrb[0].mxu0
    %608 = vmatprep.mubr.bf16.mxu0 0
    %609 = vmatmul.mubr.bf16.gmra.mrb[0].mxu0 %v555
    %v610 = vpop.f32.mrb[0].mxu0
    %v611 = vadd.f32 0.0, %v610
    %v612 = vpop.f32.mrb[0].mxu0
    %v613 = vpop.f32.mrb[0].mxu0
    %v614 = vadd.f32 0.0, %v613
    %v615 = vpop.f32.mrb[0].mxu0
    %616 = vmatprep.mubr.bf16.mxu0 0
    %617 = vmatmul.mubr.bf16.gmra.mrb[0].mxu0 %v558
    %v618 = vpop.f32.mrb[0].mxu0
    %v619 = vadd.f32 0.0, %v618
    %v620 = vpop.f32.mrb[0].mxu0
    %v621 = vpop.f32.mrb[0].mxu0
    %v622 = vadd.f32 0.0, %v621
    %v623 = vpop.f32.mrb[0].mxu0
    %624 = vdwg.mxu0
    %v625 = vadd.f32 %v384, %v595
    %v626 = vadd.f32 %v385, %v598
    %v627 = vadd.f32 %v386, %v603
    %v628 = vadd.f32 %v387, %v606
    %v629 = vadd.f32 %v388, %v611
    %v630 = vadd.f32 %v389, %v614
    %v631 = vadd.f32 %v390, %v619
    %v632 = vadd.f32 %v391, %v622
    %v633 = vld [vmem:[#allocation2] sm:$0xe]
    %v634 = vld [vmem:[#allocation2 + $0x18] sm:$0xe]
    %v635 = vld [vmem:[#allocation2 + $0x30] sm:$0xe]
    %v636 = vld [vmem:[#allocation2 + $0x48] sm:$0xe]
    %vm649 = vcmask 1042432
    %vm650 = vcmask 1046532
    %vm651 = vmor %vm649, %vm650
    %v652 = vrot.slane %v633, 5
    %v653 = vrot.slane %v652, 4
    %v654 = vrot.slane %v393, 5
    %v655 = vsel %vm651, %v653, %v654
    %v656 = vrot.slane %v654, 4
    %v657 = vrot.slane %v394, 5
    %v658 = vsel %vm651, %v656, %v657
    %v659 = vrot.slane %v634, 5
    %v660 = vrot.slane %v659, 4
    %v661 = vrot.slane %v396, 5
    %v662 = vsel %vm651, %v660, %v661
    %v663 = vrot.slane %v661, 4
    %v664 = vrot.slane %v397, 5
    %v665 = vsel %vm651, %v663, %v664
    %v666 = vrot.slane %v635, 5
    %v667 = vrot.slane %v666, 4
    %v668 = vrot.slane %v399, 5
    %v669 = vsel %vm651, %v667, %v668
    %v670 = vrot.slane %v668, 4
    %v671 = vrot.slane %v400, 5
    %v672 = vsel %vm651, %v670, %v671
    %v673 = vrot.slane %v636, 5
    %v674 = vrot.slane %v673, 4
    %v675 = vrot.slane %v402, 5
    %v676 = vsel %vm651, %v674, %v675
    %v677 = vrot.slane %v675, 4
    %v678 = vrot.slane %v403, 5
    %v679 = vsel %vm651, %v677, %v678
    %s680 = scalar_lea.vmem %s2, 64
    %v681 = vld [vmem:[%s680] sm:$0xf]
    %v682 = vld [vmem:[%s680 + $0x4] sm:$0xf]
    %v683 = vld [vmem:[%s680 + $0x8] sm:$0xf]
    %v684 = vld [vmem:[%s680 + $0xc] sm:$0xf]
    %v685 = vld [vmem:[%s680 + $0x10] sm:$0xf]
    %v686 = vld [vmem:[%s680 + $0x14] sm:$0xf]
    %v687 = vld [vmem:[%s680 + $0x18] sm:$0xf]
    %v688 = vld [vmem:[%s680 + $0x1c] sm:$0xf]
    %v689 = vunpack.c.l.b16 %v655
    %v690 = vunpack.c.l.b16 %v658
    %v691 = vunpack.c.l.b16 %v662
    %v692 = vunpack.c.l.b16 %v665
    %v693 = vunpack.c.l.b16 %v669
    %v694 = vunpack.c.l.b16 %v672
    %v695 = vunpack.c.l.b16 %v676
    %v696 = vunpack.c.l.b16 %v679
    %v697 = vpack.c.b16 %v690, %v689
    %v698 = vpack.c.b16 %v692, %v691
    %v699 = vpack.c.b16 %v694, %v693
    %v700 = vpack.c.b16 %v696, %v695
    %v709 = vunpack.c.l.b16 %v681
    %v710 = vunpack.c.l.b16 %v682
    %v711 = vunpack.c.l.b16 %v683
    %v712 = vunpack.c.l.b16 %v684
    %v713 = vunpack.c.l.b16 %v685
    %v714 = vunpack.c.l.b16 %v686
    %v715 = vunpack.c.l.b16 %v687
    %v716 = vunpack.c.l.b16 %v688
    %v717 = vpack.c.b16 %v710, %v709
    %v718 = vpack.c.b16 %v712, %v711
    %v719 = vpack.c.b16 %v714, %v713
    %v720 = vpack.c.b16 %v716, %v715
    %v726 = vsel %vm306, %v697, 0
    %v729 = vsel %vm306, %v698, 0
    %v732 = vsel %vm306, %v699, 0
    %v735 = vsel %vm306, %v700, 0
    %737 = vmatprep.subr.bf16.mxu0 0
    %738 = vmatpush1.bf16.msra.mxu0 %v717
    %739 = vmatprep.subr.bf16.mxu0 0
    %740 = vmatpush1.bf16.msra.mxu0 %v718
    %741 = vmatprep.subr.bf16.mxu0 0
    %742 = vmatpush1.bf16.msra.mxu0 %v719
    %743 = vmatprep.subr.bf16.mxu0 0
    %744 = vmatpush1.bf16.msra.mxu0 %v720
    %745 = vmatprep.subr.bf16.mxu0 0
    %746 = vmatpush1.bf16.msra.mxu0 0
    %747 = vmatprep.subr.bf16.mxu0 0
    %748 = vmatpush1.bf16.msra.mxu0 0
    %749 = vmatprep.subr.bf16.mxu0 0
    %750 = vmatpush1.bf16.msra.mxu0 0
    %751 = vmatprep.subr.bf16.mxu0 0
    %752 = vmatpush1.bf16.msra.mxu0 0
    %753 = vmatprep.subr.bf16.mxu0 0
    %754 = vmatpush1.bf16.msra.mxu0 0
    %755 = vmatprep.subr.bf16.mxu0 0
    %756 = vmatpush1.bf16.msra.mxu0 0
    %757 = vmatprep.subr.bf16.mxu0 0
    %758 = vmatpush1.bf16.msra.mxu0 0
    %759 = vmatprep.subr.bf16.mxu0 0
    %760 = vmatpush1.bf16.msra.mxu0 0
    %761 = vmatprep.subr.bf16.mxu0 0
    %762 = vmatpush1.bf16.msra.mxu0 0
    %763 = vmatprep.subr.bf16.mxu0 0
    %764 = vmatpush1.bf16.msra.mxu0 0
    %765 = vmatprep.subr.bf16.mxu0 0
    %766 = vmatpush1.bf16.msra.mxu0 0
    %767 = vmatprep.subr.bf16.mxu0 0
    %768 = vmatpush1.bf16.msra.mxu0 0
    %769 = vmatprep.mubr.bf16.mxu0 0
    %770 = vmatmul.mubr.bf16.gmra.mrb[0].mxu0 %v726
    %v771 = vpop.f32.mrb[0].mxu0
    %v772 = vadd.f32 0.0, %v771
    %v773 = vpop.f32.mrb[0].mxu0
    %v774 = vpop.f32.mrb[0].mxu0
    %v775 = vadd.f32 0.0, %v774
    %v776 = vpop.f32.mrb[0].mxu0
    %777 = vmatprep.mubr.bf16.mxu0 0
    %778 = vmatmul.mubr.bf16.gmra.mrb[0].mxu0 %v729
    %v779 = vpop.f32.mrb[0].mxu0
    %v780 = vadd.f32 0.0, %v779
    %v781 = vpop.f32.mrb[0].mxu0
    %v782 = vpop.f32.mrb[0].mxu0
    %v783 = vadd.f32 0.0, %v782
    %v784 = vpop.f32.mrb[0].mxu0
    %785 = vmatprep.mubr.bf16.mxu0 0
    %786 = vmatmul.mubr.bf16.gmra.mrb[0].mxu0 %v732
    %v787 = vpop.f32.mrb[0].mxu0
    %v788 = vadd.f32 0.0, %v787
    %v789 = vpop.f32.mrb[0].mxu0
    %v790 = vpop.f32.mrb[0].mxu0
    %v791 = vadd.f32 0.0, %v790
    %v792 = vpop.f32.mrb[0].mxu0
    %793 = vmatprep.mubr.bf16.mxu0 0
    %794 = vmatmul.mubr.bf16.gmra.mrb[0].mxu0 %v735
    %v795 = vpop.f32.mrb[0].mxu0
    %v796 = vadd.f32 0.0, %v795
    %v797 = vpop.f32.mrb[0].mxu0
    %v798 = vpop.f32.mrb[0].mxu0
    %v799 = vadd.f32 0.0, %v798
    %v800 = vpop.f32.mrb[0].mxu0
    %801 = vdwg.mxu0
    %v802 = vadd.f32 %v625, %v772
    %v803 = vadd.f32 %v626, %v775
    %v804 = vadd.f32 %v627, %v780
    %v805 = vadd.f32 %v628, %v783
    %v806 = vadd.f32 %v629, %v788
    %v807 = vadd.f32 %v630, %v791
    %v808 = vadd.f32 %v631, %v796
    %v809 = vadd.f32 %v632, %v799
    %v810 = vmax.f32 %v802, 0.0
    %v811 = vmax.f32 %v803, 0.0
    %v812 = vmax.f32 %v804, 0.0
    %v813 = vmax.f32 %v805, 0.0
    %v814 = vmax.f32 %v806, 0.0
    %v815 = vmax.f32 %v807, 0.0
    %v816 = vmax.f32 %v808, 0.0
    %v817 = vmax.f32 %v809, 0.0
    %v818 = vsub.f32 %v810, %v814
    %v819 = vsub.f32 %v811, %v815
    %v820 = vsub.f32 %v812, %v816
    %v821 = vsub.f32 %v813, %v817
    %v822 = vmul.f32 %v818, %v818
    %v823 = vmul.f32 %v819, %v819
    %v824 = vmul.f32 %v820, %v820
    %v825 = vmul.f32 %v821, %v821
    %v826 = vadd.f32 %v822, %v823
    %v827 = vadd.f32 %v826, %v824
    %v828 = vadd.f32 %v827, %v825
    %829 = vadd.xlane.f32.xlu0 %v828
    %v830 = vpop.xlane.xlu0 %829
    %v831 = vrot.slane %v830, 4
    %v832 = vadd.f32 %v830, %v831
    %v833 = vrot.slane %v832, 2
    %v834 = vadd.f32 %v832, %v833
    %v835 = vrot.slane %v834, 1
    %v836 = vadd.f32 %v834, %v835
    %s837 = vtos %v836
    %s838 = smul.f32 %s837, 0.00024414063
    %s839 = sadd.f32 %s838, 0.0
    %v840 = vpack.c.bf16 %v811, %v810
    %v841 = vpack.c.bf16 %v813, %v812
    %v842 = vpack.c.bf16 %v815, %v814
    %v843 = vpack.c.bf16 %v817, %v816
    %v848 = vunpack.c.l.b16 %v840
    %v849 = vunpack.c.h.b16 %v840
    %v850 = vunpack.c.l.b16 %v841
    %v851 = vunpack.c.h.b16 %v841
    %v852 = vunpack.c.l.b16 %v842
    %v853 = vunpack.c.h.b16 %v842
    %v854 = vunpack.c.l.b16 %v843
    %v855 = vunpack.c.h.b16 %v843
    %v856 = vpack.c.b16 %v848, %v848
    %v857 = vpack.c.b16 %v849, %v849
    %v858 = vpack.c.b16 %v850, %v850
    %v859 = vpack.c.b16 %v851, %v851
    %v860 = vpack.c.b16 %v852, %v852
    %v861 = vpack.c.b16 %v853, %v853
    %v862 = vpack.c.b16 %v854, %v854
    %v863 = vpack.c.b16 %v855, %v855
    %v865 = vshrl.u32 %v856, 16
    %v867 = vrot.slane %v865, 7
    %v868 = vshll.u32 %v856, 16
    %v870 = vor.u32 %v867, %v868
    %v871 = vrot.slane %v867, 4
    %v873 = vshrl.u32 %v857, 16
    %v875 = vrot.slane %v873, 7
    %v876 = vshll.u32 %v857, 16
    %v878 = vor.u32 %v875, %v876
    %v879 = vsel %vm108, %v871, %v878
    %v880 = vrot.slane %v875, 4
    %v882 = vshrl.u32 %v858, 16
    %v884 = vrot.slane %v882, 7
    %v885 = vshll.u32 %v858, 16
    %v887 = vor.u32 %v884, %v885
    %v888 = vrot.slane %v884, 4
    %v890 = vshrl.u32 %v859, 16
    %v892 = vrot.slane %v890, 7
    %v893 = vshll.u32 %v859, 16
    %v895 = vor.u32 %v892, %v893
    %v896 = vsel %vm108, %v888, %v895
    %v897 = vrot.slane %v892, 4
    %v899 = vshrl.u32 %v860, 16
    %v901 = vrot.slane %v899, 7
    %v902 = vshll.u32 %v860, 16
    %v904 = vor.u32 %v901, %v902
    %v905 = vrot.slane %v901, 4
    %v907 = vshrl.u32 %v861, 16
    %v909 = vrot.slane %v907, 7
    %v910 = vshll.u32 %v861, 16
    %v912 = vor.u32 %v909, %v910
    %v913 = vsel %vm108, %v905, %v912
    %v914 = vrot.slane %v909, 4
    %v916 = vshrl.u32 %v862, 16
    %v918 = vrot.slane %v916, 7
    %v919 = vshll.u32 %v862, 16
    %v921 = vor.u32 %v918, %v919
    %v922 = vrot.slane %v918, 4
    %v924 = vshrl.u32 %v863, 16
    %v926 = vrot.slane %v924, 7
    %v927 = vshll.u32 %v863, 16
    %v929 = vor.u32 %v926, %v927
    %v930 = vsel %vm108, %v922, %v929
    %v931 = vrot.slane %v926, 4
    %vm944 = vcmask 1043456
    %vm945 = vmand %vm944, %vm50
    %v946 = vld [vmem:[#allocation3] sm:$0xf]
    %v947 = vsel %vm945, %v870, %v946
    %948 = vst [vmem:[#allocation3] sm:$0xf] %v947
    %949 = vst [vmem:[#allocation3 + $0x8] sm:$0xf] %v879
    %v950 = vld [vmem:[#allocation3 + $0x10] sm:$0x1]
    %v951 = vsel %vm33, %v880, %v950
    %952 = vst [vmem:[#allocation3 + $0x10] sm:$0x1] %v951
    %v953 = vld [vmem:[#allocation3 + $0x18] sm:$0xf]
    %v954 = vsel %vm945, %v887, %v953
    %955 = vst [vmem:[#allocation3 + $0x18] sm:$0xf] %v954
    %956 = vst [vmem:[#allocation3 + $0x20] sm:$0xf] %v896
    %v957 = vld [vmem:[#allocation3 + $0x28] sm:$0x1]
    %v958 = vsel %vm33, %v897, %v957
    %959 = vst [vmem:[#allocation3 + $0x28] sm:$0x1] %v958
    %v960 = vld [vmem:[#allocation3 + $0x30] sm:$0xf]
    %v961 = vsel %vm945, %v904, %v960
    %962 = vst [vmem:[#allocation3 + $0x30] sm:$0xf] %v961
    %963 = vst [vmem:[#allocation3 + $0x38] sm:$0xf] %v913
    %v964 = vld [vmem:[#allocation3 + $0x40] sm:$0x1]
    %v965 = vsel %vm33, %v914, %v964
    %966 = vst [vmem:[#allocation3 + $0x40] sm:$0x1] %v965
    %v967 = vld [vmem:[#allocation3 + $0x48] sm:$0xf]
    %v968 = vsel %vm945, %v921, %v967
    %969 = vst [vmem:[#allocation3 + $0x48] sm:$0xf] %v968
    %970 = vst [vmem:[#allocation3 + $0x50] sm:$0xf] %v930
    %v971 = vld [vmem:[#allocation3 + $0x58] sm:$0x1]
    %v972 = vsel %vm33, %v931, %v971
    %973 = vst [vmem:[#allocation3 + $0x58] sm:$0x1] %v972
    %v974 = vld [vmem:[%s6] sm:$0x3]
    %v976 = vlaneseq
    %v977 = vshrl.u32 %v976, 7
    %v978 = vsub.s32 0, %v977
    %v979 = vrot.slane %v974, %v978
    %v980 = vlaneseq
    %v981 = vshrl.u32 %v980, 7
    %v982 = vsub.s32 1, %v981
    %v983 = vrot.slane %v974, %v982
    %v986 = vld [vmem:[#allocation3] sm:$0xf]
    %v987 = vld [vmem:[#allocation3 + $0x8] sm:$0xf]
    %v988 = vld [vmem:[#allocation3 + $0x18] sm:$0xf]
    %v989 = vld [vmem:[#allocation3 + $0x20] sm:$0xf]
    %v990 = vld [vmem:[#allocation3 + $0x30] sm:$0xf]
    %v991 = vld [vmem:[#allocation3 + $0x38] sm:$0xf]
    %v992 = vld [vmem:[#allocation3 + $0x48] sm:$0xf]
    %v993 = vld [vmem:[#allocation3 + $0x50] sm:$0xf]
    %v994 = vld [vmem:[%s3] sm:$0xff]
    %v995 = vld [vmem:[%s3 + $0x8] sm:$0xff]
    %v996 = vld [vmem:[%s3 + $0x10] sm:$0xff]
    %v997 = vld [vmem:[%s3 + $0x18] sm:$0xff]
    %v998 = vld [vmem:[%s3 + $0x20] sm:$0xff]
    %v999 = vld [vmem:[%s3 + $0x28] sm:$0xff]
    %v1000 = vld [vmem:[%s3 + $0x30] sm:$0xff]
    %v1001 = vld [vmem:[%s3 + $0x38] sm:$0xff]
    %v1002 = vld [vmem:[%s3 + $0x40] sm:$0xff]
    %v1003 = vld [vmem:[%s3 + $0x48] sm:$0xff]
    %v1004 = vld [vmem:[%s3 + $0x50] sm:$0xff]
    %v1005 = vld [vmem:[%s3 + $0x58] sm:$0xff]
    %v1006 = vld [vmem:[%s3 + $0x60] sm:$0xff]
    %v1007 = vld [vmem:[%s3 + $0x68] sm:$0xff]
    %v1008 = vld [vmem:[%s3 + $0x70] sm:$0xff]
    %v1009 = vld [vmem:[%s3 + $0x78] sm:$0xff]
    %v1018 = vunpack.c.l.b16 %v986
    %v1019 = vunpack.c.l.b16 %v987
    %v1020 = vunpack.c.l.b16 %v988
    %v1021 = vunpack.c.l.b16 %v989
    %v1022 = vunpack.c.l.b16 %v990
    %v1023 = vunpack.c.l.b16 %v991
    %v1024 = vunpack.c.l.b16 %v992
    %v1025 = vunpack.c.l.b16 %v993
    %v1026 = vpack.c.b16 %v1019, %v1018
    %v1027 = vpack.c.b16 %v1021, %v1020
    %v1028 = vpack.c.b16 %v1023, %v1022
    %v1029 = vpack.c.b16 %v1025, %v1024
    %v1050 = vunpack.c.l.b16 %v994
    %v1051 = vunpack.c.h.b16 %v994
    %v1052 = vunpack.c.l.b16 %v995
    %v1053 = vunpack.c.h.b16 %v995
    %v1054 = vunpack.c.l.b16 %v996
    %v1055 = vunpack.c.h.b16 %v996
    %v1056 = vunpack.c.l.b16 %v997
    %v1057 = vunpack.c.h.b16 %v997
    %v1058 = vunpack.c.l.b16 %v998
    %v1059 = vunpack.c.h.b16 %v998
    %v1060 = vunpack.c.l.b16 %v999
    %v1061 = vunpack.c.h.b16 %v999
    %v1062 = vunpack.c.l.b16 %v1000
    %v1063 = vunpack.c.h.b16 %v1000
    %v1064 = vunpack.c.l.b16 %v1001
    %v1065 = vunpack.c.h.b16 %v1001
    %v1066 = vunpack.c.l.b16 %v1002
    %v1067 = vunpack.c.h.b16 %v1002
    %v1068 = vunpack.c.l.b16 %v1003
    %v1069 = vunpack.c.h.b16 %v1003
    %v1070 = vunpack.c.l.b16 %v1004
    %v1071 = vunpack.c.h.b16 %v1004
    %v1072 = vunpack.c.l.b16 %v1005
    %v1073 = vunpack.c.h.b16 %v1005
    %v1074 = vunpack.c.l.b16 %v1006
    %v1075 = vunpack.c.h.b16 %v1006
    %v1076 = vunpack.c.l.b16 %v1007
    %v1077 = vunpack.c.h.b16 %v1007
    %v1078 = vunpack.c.l.b16 %v1008
    %v1079 = vunpack.c.h.b16 %v1008
    %v1080 = vunpack.c.l.b16 %v1009
    %v1081 = vunpack.c.h.b16 %v1009
    %v1082 = vpack.c.b16 %v1052, %v1050
    %v1083 = vpack.c.b16 %v1053, %v1051
    %v1084 = vpack.c.b16 %v1056, %v1054
    %v1085 = vpack.c.b16 %v1057, %v1055
    %v1086 = vpack.c.b16 %v1060, %v1058
    %v1087 = vpack.c.b16 %v1061, %v1059
    %v1088 = vpack.c.b16 %v1064, %v1062
    %v1089 = vpack.c.b16 %v1065, %v1063
    %v1090 = vpack.c.b16 %v1068, %v1066
    %v1091 = vpack.c.b16 %v1069, %v1067
    %v1092 = vpack.c.b16 %v1072, %v1070
    %v1093 = vpack.c.b16 %v1073, %v1071
    %v1094 = vpack.c.b16 %v1076, %v1074
    %v1095 = vpack.c.b16 %v1077, %v1075
    %v1096 = vpack.c.b16 %v1080, %v1078
    %v1097 = vpack.c.b16 %v1081, %v1079
    %1114 = vmatprep.subr.bf16.mxu0 %v1083
    %1115 = vmatpush1.bf16.msra.mxu0 %v1082
    %1116 = vmatprep.subr.bf16.mxu0 %v1085
    %1117 = vmatpush1.bf16.msra.mxu0 %v1084
    %1118 = vmatprep.subr.bf16.mxu0 %v1087
    %1119 = vmatpush1.bf16.msra.mxu0 %v1086
    %1120 = vmatprep.subr.bf16.mxu0 %v1089
    %1121 = vmatpush1.bf16.msra.mxu0 %v1088
    %1122 = vmatprep.subr.bf16.mxu0 %v1091
    %1123 = vmatpush1.bf16.msra.mxu0 %v1090
    %1124 = vmatprep.subr.bf16.mxu0 %v1093
    %1125 = vmatpush1.bf16.msra.mxu0 %v1092
    %1126 = vmatprep.subr.bf16.mxu0 %v1095
    %1127 = vmatpush1.bf16.msra.mxu0 %v1094
    %1128 = vmatprep.subr.bf16.mxu0 %v1097
    %1129 = vmatpush1.bf16.msra.mxu0 %v1096
    %1130 = vmatprep.subr.bf16.mxu0 0
    %1131 = vmatpush1.bf16.msra.mxu0 0
    %1132 = vmatprep.subr.bf16.mxu0 0
    %1133 = vmatpush1.bf16.msra.mxu0 0
    %1134 = vmatprep.subr.bf16.mxu0 0
    %1135 = vmatpush1.bf16.msra.mxu0 0
    %1136 = vmatprep.subr.bf16.mxu0 0
    %1137 = vmatpush1.bf16.msra.mxu0 0
    %1138 = vmatprep.subr.bf16.mxu0 0
    %1139 = vmatpush1.bf16.msra.mxu0 0
    %1140 = vmatprep.subr.bf16.mxu0 0
    %1141 = vmatpush1.bf16.msra.mxu0 0
    %1142 = vmatprep.subr.bf16.mxu0 0
    %1143 = vmatpush1.bf16.msra.mxu0 0
    %1144 = vmatprep.subr.bf16.mxu0 0
    %1145 = vmatpush1.bf16.msra.mxu0 0
    %1146 = vmatprep.mubr.bf16.mxu0 0
    %1147 = vmatmul.mubr.bf16.gmra.mrb[0].mxu0 %v1026
    %v1148 = vpop.f32.mrb[0].mxu0
    %v1149 = vadd.f32 0.0, %v1148
    %v1150 = vpop.f32.mrb[0].mxu0
    %v1151 = vadd.f32 0.0, %v1150
    %v1152 = vpop.f32.mrb[0].mxu0
    %v1153 = vadd.f32 0.0, %v1152
    %v1154 = vpop.f32.mrb[0].mxu0
    %v1155 = vadd.f32 0.0, %v1154
    %1156 = vmatprep.mubr.bf16.mxu0 0
    %1157 = vmatmul.mubr.bf16.gmra.mrb[0].mxu0 %v1027
    %v1158 = vpop.f32.mrb[0].mxu0
    %v1159 = vadd.f32 0.0, %v1158
    %v1160 = vpop.f32.mrb[0].mxu0
    %v1161 = vadd.f32 0.0, %v1160
    %v1162 = vpop.f32.mrb[0].mxu0
    %v1163 = vadd.f32 0.0, %v1162
    %v1164 = vpop.f32.mrb[0].mxu0
    %v1165 = vadd.f32 0.0, %v1164
    %1166 = vmatprep.mubr.bf16.mxu0 0
    %1167 = vmatmul.mubr.bf16.gmra.mrb[0].mxu0 %v1028
    %v1168 = vpop.f32.mrb[0].mxu0
    %v1169 = vadd.f32 0.0, %v1168
    %v1170 = vpop.f32.mrb[0].mxu0
    %v1171 = vadd.f32 0.0, %v1170
    %v1172 = vpop.f32.mrb[0].mxu0
    %v1173 = vadd.f32 0.0, %v1172
    %v1174 = vpop.f32.mrb[0].mxu0
    %v1175 = vadd.f32 0.0, %v1174
    %1176 = vmatprep.mubr.bf16.mxu0 0
    %1177 = vmatmul.mubr.bf16.gmra.mrb[0].mxu0 %v1029
    %v1178 = vpop.f32.mrb[0].mxu0
    %v1179 = vadd.f32 0.0, %v1178
    %v1180 = vpop.f32.mrb[0].mxu0
    %v1181 = vadd.f32 0.0, %v1180
    %v1182 = vpop.f32.mrb[0].mxu0
    %v1183 = vadd.f32 0.0, %v1182
    %v1184 = vpop.f32.mrb[0].mxu0
    %v1185 = vadd.f32 0.0, %v1184
    %1186 = vdwg.mxu0
    %v1187 = vadd.f32 %v979, %v1149
    %v1188 = vadd.f32 %v983, %v1151
    %v1189 = vadd.f32 %v979, %v1153
    %v1190 = vadd.f32 %v983, %v1155
    %v1191 = vadd.f32 %v979, %v1159
    %v1192 = vadd.f32 %v983, %v1161
    %v1193 = vadd.f32 %v979, %v1163
    %v1194 = vadd.f32 %v983, %v1165
    %v1195 = vadd.f32 %v979, %v1169
    %v1196 = vadd.f32 %v983, %v1171
    %v1197 = vadd.f32 %v979, %v1173
    %v1198 = vadd.f32 %v983, %v1175
    %v1199 = vadd.f32 %v979, %v1179
    %v1200 = vadd.f32 %v983, %v1181
    %v1201 = vadd.f32 %v979, %v1183
    %v1202 = vadd.f32 %v983, %v1185
    %v1203 = vld [vmem:[#allocation3] sm:$0xf]
    %v1204 = vld [vmem:[#allocation3 + $0x8] sm:$0xf]
    %v1205 = vld [vmem:[#allocation3 + $0x10] sm:$0x1]
    %v1206 = vld [vmem:[#allocation3 + $0x18] sm:$0xf]
    %v1207 = vld [vmem:[#allocation3 + $0x20] sm:$0xf]
    %v1208 = vld [vmem:[#allocation3 + $0x28] sm:$0x1]
    %v1209 = vld [vmem:[#allocation3 + $0x30] sm:$0xf]
    %v1210 = vld [vmem:[#allocation3 + $0x38] sm:$0xf]
    %v1211 = vld [vmem:[#allocation3 + $0x40] sm:$0x1]
    %v1212 = vld [vmem:[#allocation3 + $0x48] sm:$0xf]
    %v1213 = vld [vmem:[#allocation3 + $0x50] sm:$0xf]
    %v1214 = vld [vmem:[#allocation3 + $0x58] sm:$0x1]
    %v1216 = vshrl.u32 %v1203, 16
    %v1218 = vrot.slane %v1216, 4
    %v1219 = vshll.u32 %v1203, 16
    %v1221 = vrot.slane %v1219, 5
    %v1222 = vor.u32 %v1218, %v1221
    %v1223 = vrot.slane %v1222, 4
    %v1225 = vshll.u32 %v1204, 16
    %v1227 = vrot.slane %v1225, 5
    %v1228 = vsel %vm406, %v1223, %v1227
    %v1229 = vshrl.u32 %v1204, 16
    %v1231 = vrot.slane %v1229, 4
    %v1232 = vor.u32 %v1231, %v1227
    %v1233 = vrot.slane %v1232, 4
    %v1235 = vshll.u32 %v1205, 16
    %v1237 = vrot.slane %v1235, 5
    %v1238 = vsel %vm406, %v1233, %v1237
    %v1240 = vshrl.u32 %v1206, 16
    %v1242 = vrot.slane %v1240, 4
    %v1243 = vshll.u32 %v1206, 16
    %v1245 = vrot.slane %v1243, 5
    %v1246 = vor.u32 %v1242, %v1245
    %v1247 = vrot.slane %v1246, 4
    %v1249 = vshll.u32 %v1207, 16
    %v1251 = vrot.slane %v1249, 5
    %v1252 = vsel %vm406, %v1247, %v1251
    %v1253 = vshrl.u32 %v1207, 16
    %v1255 = vrot.slane %v1253, 4
    %v1256 = vor.u32 %v1255, %v1251
    %v1257 = vrot.slane %v1256, 4
    %v1259 = vshll.u32 %v1208, 16
    %v1261 = vrot.slane %v1259, 5
    %v1262 = vsel %vm406, %v1257, %v1261
    %v1264 = vshrl.u32 %v1209, 16
    %v1266 = vrot.slane %v1264, 4
    %v1267 = vshll.u32 %v1209, 16
    %v1269 = vrot.slane %v1267, 5
    %v1270 = vor.u32 %v1266, %v1269
    %v1271 = vrot.slane %v1270, 4
    %v1273 = vshll.u32 %v1210, 16
    %v1275 = vrot.slane %v1273, 5
    %v1276 = vsel %vm406, %v1271, %v1275
    %v1277 = vshrl.u32 %v1210, 16
    %v1279 = vrot.slane %v1277, 4
    %v1280 = vor.u32 %v1279, %v1275
    %v1281 = vrot.slane %v1280, 4
    %v1283 = vshll.u32 %v1211, 16
    %v1285 = vrot.slane %v1283, 5
    %v1286 = vsel %vm406, %v1281, %v1285
    %v1288 = vshrl.u32 %v1212, 16
    %v1290 = vrot.slane %v1288, 4
    %v1291 = vshll.u32 %v1212, 16
    %v1293 = vrot.slane %v1291, 5
    %v1294 = vor.u32 %v1290, %v1293
    %v1295 = vrot.slane %v1294, 4
    %v1297 = vshll.u32 %v1213, 16
    %v1299 = vrot.slane %v1297, 5
    %v1300 = vsel %vm406, %v1295, %v1299
    %v1301 = vshrl.u32 %v1213, 16
    %v1303 = vrot.slane %v1301, 4
    %v1304 = vor.u32 %v1303, %v1299
    %v1305 = vrot.slane %v1304, 4
    %v1307 = vshll.u32 %v1214, 16
    %v1309 = vrot.slane %v1307, 5
    %v1310 = vsel %vm406, %v1305, %v1309
    %s1311 = scalar_lea.vmem %s3, 128
    %v1312 = vld [vmem:[%s1311] sm:$0xff]
    %v1313 = vld [vmem:[%s1311 + $0x8] sm:$0xff]
    %v1314 = vld [vmem:[%s1311 + $0x10] sm:$0xff]
    %v1315 = vld [vmem:[%s1311 + $0x18] sm:$0xff]
    %v1316 = vld [vmem:[%s1311 + $0x20] sm:$0xff]
    %v1317 = vld [vmem:[%s1311 + $0x28] sm:$0xff]
    %v1318 = vld [vmem:[%s1311 + $0x30] sm:$0xff]
    %v1319 = vld [vmem:[%s1311 + $0x38] sm:$0xff]
    %v1320 = vld [vmem:[%s1311 + $0x40] sm:$0xff]
    %v1321 = vld [vmem:[%s1311 + $0x48] sm:$0xff]
    %v1322 = vld [vmem:[%s1311 + $0x50] sm:$0xff]
    %v1323 = vld [vmem:[%s1311 + $0x58] sm:$0xff]
    %v1324 = vld [vmem:[%s1311 + $0x60] sm:$0xff]
    %v1325 = vld [vmem:[%s1311 + $0x68] sm:$0xff]
    %v1326 = vld [vmem:[%s1311 + $0x70] sm:$0xff]
    %v1327 = vld [vmem:[%s1311 + $0x78] sm:$0xff]
    %v1328 = vunpack.c.l.b16 %v1228
    %v1329 = vunpack.c.l.b16 %v1238
    %v1330 = vunpack.c.l.b16 %v1252
    %v1331 = vunpack.c.l.b16 %v1262
    %v1332 = vunpack.c.l.b16 %v1276
    %v1333 = vunpack.c.l.b16 %v1286
    %v1334 = vunpack.c.l.b16 %v1300
    %v1335 = vunpack.c.l.b16 %v1310
    %v1336 = vpack.c.b16 %v1329, %v1328
    %v1337 = vpack.c.b16 %v1331, %v1330
    %v1338 = vpack.c.b16 %v1333, %v1332
    %v1339 = vpack.c.b16 %v1335, %v1334
    %v1360 = vunpack.c.l.b16 %v1312
    %v1361 = vunpack.c.h.b16 %v1312
    %v1362 = vunpack.c.l.b16 %v1313
    %v1363 = vunpack.c.h.b16 %v1313
    %v1364 = vunpack.c.l.b16 %v1314
    %v1365 = vunpack.c.h.b16 %v1314
    %v1366 = vunpack.c.l.b16 %v1315
    %v1367 = vunpack.c.h.b16 %v1315
    %v1368 = vunpack.c.l.b16 %v1316
    %v1369 = vunpack.c.h.b16 %v1316
    %v1370 = vunpack.c.l.b16 %v1317
    %v1371 = vunpack.c.h.b16 %v1317
    %v1372 = vunpack.c.l.b16 %v1318
    %v1373 = vunpack.c.h.b16 %v1318
    %v1374 = vunpack.c.l.b16 %v1319
    %v1375 = vunpack.c.h.b16 %v1319
    %v1376 = vunpack.c.l.b16 %v1320
    %v1377 = vunpack.c.h.b16 %v1320
    %v1378 = vunpack.c.l.b16 %v1321
    %v1379 = vunpack.c.h.b16 %v1321
    %v1380 = vunpack.c.l.b16 %v1322
    %v1381 = vunpack.c.h.b16 %v1322
    %v1382 = vunpack.c.l.b16 %v1323
    %v1383 = vunpack.c.h.b16 %v1323
    %v1384 = vunpack.c.l.b16 %v1324
    %v1385 = vunpack.c.h.b16 %v1324
    %v1386 = vunpack.c.l.b16 %v1325
    %v1387 = vunpack.c.h.b16 %v1325
    %v1388 = vunpack.c.l.b16 %v1326
    %v1389 = vunpack.c.h.b16 %v1326
    %v1390 = vunpack.c.l.b16 %v1327
    %v1391 = vunpack.c.h.b16 %v1327
    %v1392 = vpack.c.b16 %v1362, %v1360
    %v1393 = vpack.c.b16 %v1363, %v1361
    %v1394 = vpack.c.b16 %v1366, %v1364
    %v1395 = vpack.c.b16 %v1367, %v1365
    %v1396 = vpack.c.b16 %v1370, %v1368
    %v1397 = vpack.c.b16 %v1371, %v1369
    %v1398 = vpack.c.b16 %v1374, %v1372
    %v1399 = vpack.c.b16 %v1375, %v1373
    %v1400 = vpack.c.b16 %v1378, %v1376
    %v1401 = vpack.c.b16 %v1379, %v1377
    %v1402 = vpack.c.b16 %v1382, %v1380
    %v1403 = vpack.c.b16 %v1383, %v1381
    %v1404 = vpack.c.b16 %v1386, %v1384
    %v1405 = vpack.c.b16 %v1387, %v1385
    %v1406 = vpack.c.b16 %v1390, %v1388
    %v1407 = vpack.c.b16 %v1391, %v1389
    %1424 = vmatprep.subr.bf16.mxu0 %v1393
    %1425 = vmatpush1.bf16.msra.mxu0 %v1392
    %1426 = vmatprep.subr.bf16.mxu0 %v1395
    %1427 = vmatpush1.bf16.msra.mxu0 %v1394
    %1428 = vmatprep.subr.bf16.mxu0 %v1397
    %1429 = vmatpush1.bf16.msra.mxu0 %v1396
    %1430 = vmatprep.subr.bf16.mxu0 %v1399
    %1431 = vmatpush1.bf16.msra.mxu0 %v1398
    %1432 = vmatprep.subr.bf16.mxu0 %v1401
    %1433 = vmatpush1.bf16.msra.mxu0 %v1400
    %1434 = vmatprep.subr.bf16.mxu0 %v1403
    %1435 = vmatpush1.bf16.msra.mxu0 %v1402
    %1436 = vmatprep.subr.bf16.mxu0 %v1405
    %1437 = vmatpush1.bf16.msra.mxu0 %v1404
    %1438 = vmatprep.subr.bf16.mxu0 %v1407
    %1439 = vmatpush1.bf16.msra.mxu0 %v1406
    %1440 = vmatprep.subr.bf16.mxu0 0
    %1441 = vmatpush1.bf16.msra.mxu0 0
    %1442 = vmatprep.subr.bf16.mxu0 0
    %1443 = vmatpush1.bf16.msra.mxu0 0
    %1444 = vmatprep.subr.bf16.mxu0 0
    %1445 = vmatpush1.bf16.msra.mxu0 0
    %1446 = vmatprep.subr.bf16.mxu0 0
    %1447 = vmatpush1.bf16.msra.mxu0 0
    %1448 = vmatprep.subr.bf16.mxu0 0
    %1449 = vmatpush1.bf16.msra.mxu0 0
    %1450 = vmatprep.subr.bf16.mxu0 0
    %1451 = vmatpush1.bf16.msra.mxu0 0
    %1452 = vmatprep.subr.bf16.mxu0 0
    %1453 = vmatpush1.bf16.msra.mxu0 0
    %1454 = vmatprep.subr.bf16.mxu0 0
    %1455 = vmatpush1.bf16.msra.mxu0 0
    %1456 = vmatprep.mubr.bf16.mxu0 0
    %1457 = vmatmul.mubr.bf16.gmra.mrb[0].mxu0 %v1336
    %v1458 = vpop.f32.mrb[0].mxu0
    %v1459 = vadd.f32 0.0, %v1458
    %v1460 = vpop.f32.mrb[0].mxu0
    %v1461 = vadd.f32 0.0, %v1460
    %v1462 = vpop.f32.mrb[0].mxu0
    %v1463 = vadd.f32 0.0, %v1462
    %v1464 = vpop.f32.mrb[0].mxu0
    %v1465 = vadd.f32 0.0, %v1464
    %1466 = vmatprep.mubr.bf16.mxu0 0
    %1467 = vmatmul.mubr.bf16.gmra.mrb[0].mxu0 %v1337
    %v1468 = vpop.f32.mrb[0].mxu0
    %v1469 = vadd.f32 0.0, %v1468
    %v1470 = vpop.f32.mrb[0].mxu0
    %v1471 = vadd.f32 0.0, %v1470
    %v1472 = vpop.f32.mrb[0].mxu0
    %v1473 = vadd.f32 0.0, %v1472
    %v1474 = vpop.f32.mrb[0].mxu0
    %v1475 = vadd.f32 0.0, %v1474
    %1476 = vmatprep.mubr.bf16.mxu0 0
    %1477 = vmatmul.mubr.bf16.gmra.mrb[0].mxu0 %v1338
    %v1478 = vpop.f32.mrb[0].mxu0
    %v1479 = vadd.f32 0.0, %v1478
    %v1480 = vpop.f32.mrb[0].mxu0
    %v1481 = vadd.f32 0.0, %v1480
    %v1482 = vpop.f32.mrb[0].mxu0
    %v1483 = vadd.f32 0.0, %v1482
    %v1484 = vpop.f32.mrb[0].mxu0
    %v1485 = vadd.f32 0.0, %v1484
    %1486 = vmatprep.mubr.bf16.mxu0 0
    %1487 = vmatmul.mubr.bf16.gmra.mrb[0].mxu0 %v1339
    %v1488 = vpop.f32.mrb[0].mxu0
    %v1489 = vadd.f32 0.0, %v1488
    %v1490 = vpop.f32.mrb[0].mxu0
    %v1491 = vadd.f32 0.0, %v1490
    %v1492 = vpop.f32.mrb[0].mxu0
    %v1493 = vadd.f32 0.0, %v1492
    %v1494 = vpop.f32.mrb[0].mxu0
    %v1495 = vadd.f32 0.0, %v1494
    %1496 = vdwg.mxu0
    %v1497 = vadd.f32 %v1187, %v1459
    %v1498 = vadd.f32 %v1188, %v1461
    %v1499 = vadd.f32 %v1189, %v1463
    %v1500 = vadd.f32 %v1190, %v1465
    %v1501 = vadd.f32 %v1191, %v1469
    %v1502 = vadd.f32 %v1192, %v1471
    %v1503 = vadd.f32 %v1193, %v1473
    %v1504 = vadd.f32 %v1194, %v1475
    %v1505 = vadd.f32 %v1195, %v1479
    %v1506 = vadd.f32 %v1196, %v1481
    %v1507 = vadd.f32 %v1197, %v1483
    %v1508 = vadd.f32 %v1198, %v1485
    %v1509 = vadd.f32 %v1199, %v1489
    %v1510 = vadd.f32 %v1200, %v1491
    %v1511 = vadd.f32 %v1201, %v1493
    %v1512 = vadd.f32 %v1202, %v1495
    %v1513 = vld [vmem:[#allocation3] sm:$0xe]
    %v1514 = vld [vmem:[#allocation3 + $0x18] sm:$0xe]
    %v1515 = vld [vmem:[#allocation3 + $0x30] sm:$0xe]
    %v1516 = vld [vmem:[#allocation3 + $0x48] sm:$0xe]
    %v1529 = vrot.slane %v1513, 5
    %v1530 = vrot.slane %v1529, 4
    %v1531 = vrot.slane %v1204, 5
    %v1532 = vsel %vm651, %v1530, %v1531
    %v1533 = vrot.slane %v1531, 4
    %v1534 = vrot.slane %v1205, 5
    %v1535 = vsel %vm651, %v1533, %v1534
    %v1536 = vrot.slane %v1514, 5
    %v1537 = vrot.slane %v1536, 4
    %v1538 = vrot.slane %v1207, 5
    %v1539 = vsel %vm651, %v1537, %v1538
    %v1540 = vrot.slane %v1538, 4
    %v1541 = vrot.slane %v1208, 5
    %v1542 = vsel %vm651, %v1540, %v1541
    %v1543 = vrot.slane %v1515, 5
    %v1544 = vrot.slane %v1543, 4
    %v1545 = vrot.slane %v1210, 5
    %v1546 = vsel %vm651, %v1544, %v1545
    %v1547 = vrot.slane %v1545, 4
    %v1548 = vrot.slane %v1211, 5
    %v1549 = vsel %vm651, %v1547, %v1548
    %v1550 = vrot.slane %v1516, 5
    %v1551 = vrot.slane %v1550, 4
    %v1552 = vrot.slane %v1213, 5
    %v1553 = vsel %vm651, %v1551, %v1552
    %v1554 = vrot.slane %v1552, 4
    %v1555 = vrot.slane %v1214, 5
    %v1556 = vsel %vm651, %v1554, %v1555
    %s1557 = scalar_lea.vmem %s3, 256
    %v1558 = vld [vmem:[%s1557] sm:$0xff]
    %v1559 = vld [vmem:[%s1557 + $0x8] sm:$0xff]
    %v1560 = vld [vmem:[%s1557 + $0x10] sm:$0xff]
    %v1561 = vld [vmem:[%s1557 + $0x18] sm:$0xff]
    %v1562 = vld [vmem:[%s1557 + $0x20] sm:$0xff]
    %v1563 = vld [vmem:[%s1557 + $0x28] sm:$0xff]
    %v1564 = vld [vmem:[%s1557 + $0x30] sm:$0xff]
    %v1565 = vld [vmem:[%s1557 + $0x38] sm:$0xff]
    %v1566 = vld [vmem:[%s1557 + $0x40] sm:$0xff]
    %v1567 = vld [vmem:[%s1557 + $0x48] sm:$0xff]
    %v1568 = vld [vmem:[%s1557 + $0x50] sm:$0xff]
    %v1569 = vld [vmem:[%s1557 + $0x58] sm:$0xff]
    %v1570 = vld [vmem:[%s1557 + $0x60] sm:$0xff]
    %v1571 = vld [vmem:[%s1557 + $0x68] sm:$0xff]
    %v1572 = vld [vmem:[%s1557 + $0x70] sm:$0xff]
    %v1573 = vld [vmem:[%s1557 + $0x78] sm:$0xff]
    %v1574 = vunpack.c.l.b16 %v1532
    %v1575 = vunpack.c.l.b16 %v1535
    %v1576 = vunpack.c.l.b16 %v1539
    %v1577 = vunpack.c.l.b16 %v1542
    %v1578 = vunpack.c.l.b16 %v1546
    %v1579 = vunpack.c.l.b16 %v1549
    %v1580 = vunpack.c.l.b16 %v1553
    %v1581 = vunpack.c.l.b16 %v1556
    %v1582 = vpack.c.b16 %v1575, %v1574
    %v1583 = vpack.c.b16 %v1577, %v1576
    %v1584 = vpack.c.b16 %v1579, %v1578
    %v1585 = vpack.c.b16 %v1581, %v1580
    %v1606 = vunpack.c.l.b16 %v1558
    %v1607 = vunpack.c.h.b16 %v1558
    %v1608 = vunpack.c.l.b16 %v1559
    %v1609 = vunpack.c.h.b16 %v1559
    %v1610 = vunpack.c.l.b16 %v1560
    %v1611 = vunpack.c.h.b16 %v1560
    %v1612 = vunpack.c.l.b16 %v1561
    %v1613 = vunpack.c.h.b16 %v1561
    %v1614 = vunpack.c.l.b16 %v1562
    %v1615 = vunpack.c.h.b16 %v1562
    %v1616 = vunpack.c.l.b16 %v1563
    %v1617 = vunpack.c.h.b16 %v1563
    %v1618 = vunpack.c.l.b16 %v1564
    %v1619 = vunpack.c.h.b16 %v1564
    %v1620 = vunpack.c.l.b16 %v1565
    %v1621 = vunpack.c.h.b16 %v1565
    %v1622 = vunpack.c.l.b16 %v1566
    %v1623 = vunpack.c.h.b16 %v1566
    %v1624 = vunpack.c.l.b16 %v1567
    %v1625 = vunpack.c.h.b16 %v1567
    %v1626 = vunpack.c.l.b16 %v1568
    %v1627 = vunpack.c.h.b16 %v1568
    %v1628 = vunpack.c.l.b16 %v1569
    %v1629 = vunpack.c.h.b16 %v1569
    %v1630 = vunpack.c.l.b16 %v1570
    %v1631 = vunpack.c.h.b16 %v1570
    %v1632 = vunpack.c.l.b16 %v1571
    %v1633 = vunpack.c.h.b16 %v1571
    %v1634 = vunpack.c.l.b16 %v1572
    %v1635 = vunpack.c.h.b16 %v1572
    %v1636 = vunpack.c.l.b16 %v1573
    %v1637 = vunpack.c.h.b16 %v1573
    %v1638 = vpack.c.b16 %v1608, %v1606
    %v1639 = vpack.c.b16 %v1609, %v1607
    %v1640 = vpack.c.b16 %v1612, %v1610
    %v1641 = vpack.c.b16 %v1613, %v1611
    %v1642 = vpack.c.b16 %v1616, %v1614
    %v1643 = vpack.c.b16 %v1617, %v1615
    %v1644 = vpack.c.b16 %v1620, %v1618
    %v1645 = vpack.c.b16 %v1621, %v1619
    %v1646 = vpack.c.b16 %v1624, %v1622
    %v1647 = vpack.c.b16 %v1625, %v1623
    %v1648 = vpack.c.b16 %v1628, %v1626
    %v1649 = vpack.c.b16 %v1629, %v1627
    %v1650 = vpack.c.b16 %v1632, %v1630
    %v1651 = vpack.c.b16 %v1633, %v1631
    %v1652 = vpack.c.b16 %v1636, %v1634
    %v1653 = vpack.c.b16 %v1637, %v1635
    %1670 = vmatprep.subr.bf16.mxu0 %v1639
    %1671 = vmatpush1.bf16.msra.mxu0 %v1638
    %1672 = vmatprep.subr.bf16.mxu0 %v1641
    %1673 = vmatpush1.bf16.msra.mxu0 %v1640
    %1674 = vmatprep.subr.bf16.mxu0 %v1643
    %1675 = vmatpush1.bf16.msra.mxu0 %v1642
    %1676 = vmatprep.subr.bf16.mxu0 %v1645
    %1677 = vmatpush1.bf16.msra.mxu0 %v1644
    %1678 = vmatprep.subr.bf16.mxu0 %v1647
    %1679 = vmatpush1.bf16.msra.mxu0 %v1646
    %1680 = vmatprep.subr.bf16.mxu0 %v1649
    %1681 = vmatpush1.bf16.msra.mxu0 %v1648
    %1682 = vmatprep.subr.bf16.mxu0 %v1651
    %1683 = vmatpush1.bf16.msra.mxu0 %v1650
    %1684 = vmatprep.subr.bf16.mxu0 %v1653
    %1685 = vmatpush1.bf16.msra.mxu0 %v1652
    %1686 = vmatprep.subr.bf16.mxu0 0
    %1687 = vmatpush1.bf16.msra.mxu0 0
    %1688 = vmatprep.subr.bf16.mxu0 0
    %1689 = vmatpush1.bf16.msra.mxu0 0
    %1690 = vmatprep.subr.bf16.mxu0 0
    %1691 = vmatpush1.bf16.msra.mxu0 0
    %1692 = vmatprep.subr.bf16.mxu0 0
    %1693 = vmatpush1.bf16.msra.mxu0 0
    %1694 = vmatprep.subr.bf16.mxu0 0
    %1695 = vmatpush1.bf16.msra.mxu0 0
    %1696 = vmatprep.subr.bf16.mxu0 0
    %1697 = vmatpush1.bf16.msra.mxu0 0
    %1698 = vmatprep.subr.bf16.mxu0 0
    %1699 = vmatpush1.bf16.msra.mxu0 0
    %1700 = vmatprep.subr.bf16.mxu0 0
    %1701 = vmatpush1.bf16.msra.mxu0 0
    %1702 = vmatprep.mubr.bf16.mxu0 0
    %1703 = vmatmul.mubr.bf16.gmra.mrb[0].mxu0 %v1582
    %v1704 = vpop.f32.mrb[0].mxu0
    %v1705 = vadd.f32 0.0, %v1704
    %v1706 = vpop.f32.mrb[0].mxu0
    %v1707 = vadd.f32 0.0, %v1706
    %v1708 = vpop.f32.mrb[0].mxu0
    %v1709 = vadd.f32 0.0, %v1708
    %v1710 = vpop.f32.mrb[0].mxu0
    %v1711 = vadd.f32 0.0, %v1710
    %1712 = vmatprep.mubr.bf16.mxu0 0
    %1713 = vmatmul.mubr.bf16.gmra.mrb[0].mxu0 %v1583
    %v1714 = vpop.f32.mrb[0].mxu0
    %v1715 = vadd.f32 0.0, %v1714
    %v1716 = vpop.f32.mrb[0].mxu0
    %v1717 = vadd.f32 0.0, %v1716
    %v1718 = vpop.f32.mrb[0].mxu0
    %v1719 = vadd.f32 0.0, %v1718
    %v1720 = vpop.f32.mrb[0].mxu0
    %v1721 = vadd.f32 0.0, %v1720
    %1722 = vmatprep.mubr.bf16.mxu0 0
    %1723 = vmatmul.mubr.bf16.gmra.mrb[0].mxu0 %v1584
    %v1724 = vpop.f32.mrb[0].mxu0
    %v1725 = vadd.f32 0.0, %v1724
    %v1726 = vpop.f32.mrb[0].mxu0
    %v1727 = vadd.f32 0.0, %v1726
    %v1728 = vpop.f32.mrb[0].mxu0
    %v1729 = vadd.f32 0.0, %v1728
    %v1730 = vpop.f32.mrb[0].mxu0
    %v1731 = vadd.f32 0.0, %v1730
    %1732 = vmatprep.mubr.bf16.mxu0 0
    %1733 = vmatmul.mubr.bf16.gmra.mrb[0].mxu0 %v1585
    %v1734 = vpop.f32.mrb[0].mxu0
    %v1735 = vadd.f32 0.0, %v1734
    %v1736 = vpop.f32.mrb[0].mxu0
    %v1737 = vadd.f32 0.0, %v1736
    %v1738 = vpop.f32.mrb[0].mxu0
    %v1739 = vadd.f32 0.0, %v1738
    %v1740 = vpop.f32.mrb[0].mxu0
    %v1741 = vadd.f32 0.0, %v1740
    %1742 = vdwg.mxu0
    %v1743 = vadd.f32 %v1497, %v1705
    %v1744 = vadd.f32 %v1498, %v1707
    %v1745 = vadd.f32 %v1499, %v1709
    %v1746 = vadd.f32 %v1500, %v1711
    %v1747 = vadd.f32 %v1501, %v1715
    %v1748 = vadd.f32 %v1502, %v1717
    %v1749 = vadd.f32 %v1503, %v1719
    %v1750 = vadd.f32 %v1504, %v1721
    %v1751 = vadd.f32 %v1505, %v1725
    %v1752 = vadd.f32 %v1506, %v1727
    %v1753 = vadd.f32 %v1507, %v1729
    %v1754 = vadd.f32 %v1508, %v1731
    %v1755 = vadd.f32 %v1509, %v1735
    %v1756 = vadd.f32 %v1510, %v1737
    %v1757 = vadd.f32 %v1511, %v1739
    %v1758 = vadd.f32 %v1512, %v1741
    %v1759 = vmax.f32 %v1743, 0.0
    %v1760 = vmax.f32 %v1744, 0.0
    %v1761 = vmax.f32 %v1745, 0.0
    %v1762 = vmax.f32 %v1746, 0.0
    %v1763 = vmax.f32 %v1747, 0.0
    %v1764 = vmax.f32 %v1748, 0.0
    %v1765 = vmax.f32 %v1749, 0.0
    %v1766 = vmax.f32 %v1750, 0.0
    %v1767 = vmax.f32 %v1751, 0.0
    %v1768 = vmax.f32 %v1752, 0.0
    %v1769 = vmax.f32 %v1753, 0.0
    %v1770 = vmax.f32 %v1754, 0.0
    %v1771 = vmax.f32 %v1755, 0.0
    %v1772 = vmax.f32 %v1756, 0.0
    %v1773 = vmax.f32 %v1757, 0.0
    %v1774 = vmax.f32 %v1758, 0.0
    %v1775 = vpack.c.bf16 %v1761, %v1759
    %v1776 = vpack.c.bf16 %v1762, %v1760
    %v1777 = vpack.c.bf16 %v1765, %v1763
    %v1778 = vpack.c.bf16 %v1766, %v1764
    %v1779 = vpack.c.bf16 %v1769, %v1767
    %v1780 = vpack.c.bf16 %v1770, %v1768
    %v1781 = vpack.c.bf16 %v1773, %v1771
    %v1782 = vpack.c.bf16 %v1774, %v1772
    %v1791 = vunpack.c.l.b16 %v1775
    %v1792 = vunpack.c.l.b16 %v1776
    %v1793 = vunpack.c.h.b16 %v1775
    %v1794 = vunpack.c.h.b16 %v1776
    %v1795 = vunpack.c.l.b16 %v1777
    %v1796 = vunpack.c.l.b16 %v1778
    %v1797 = vunpack.c.h.b16 %v1777
    %v1798 = vunpack.c.h.b16 %v1778
    %v1799 = vunpack.c.l.b16 %v1779
    %v1800 = vunpack.c.l.b16 %v1780
    %v1801 = vunpack.c.h.b16 %v1779
    %v1802 = vunpack.c.h.b16 %v1780
    %v1803 = vunpack.c.l.b16 %v1781
    %v1804 = vunpack.c.l.b16 %v1782
    %v1805 = vunpack.c.h.b16 %v1781
    %v1806 = vunpack.c.h.b16 %v1782
    %v1807 = vpack.c.b16 %v1792, %v1791
    %v1808 = vpack.c.b16 %v1794, %v1793
    %v1809 = vpack.c.b16 %v1796, %v1795
    %v1810 = vpack.c.b16 %v1798, %v1797
    %v1811 = vpack.c.b16 %v1800, %v1799
    %v1812 = vpack.c.b16 %v1802, %v1801
    %v1813 = vpack.c.b16 %v1804, %v1803
    %v1814 = vpack.c.b16 %v1806, %v1805
    %v1816 = vshrl.u32 %v1807, 16
    %v1818 = vrot.slane %v1816, 7
    %v1819 = vshll.u32 %v1807, 16
    %v1821 = vor.u32 %v1818, %v1819
    %v1822 = vrot.slane %v1818, 4
    %v1824 = vshrl.u32 %v1808, 16
    %v1826 = vrot.slane %v1824, 7
    %v1827 = vshll.u32 %v1808, 16
    %v1829 = vor.u32 %v1826, %v1827
    %v1830 = vsel %vm108, %v1822, %v1829
    %v1831 = vrot.slane %v1826, 4
    %v1833 = vshrl.u32 %v1809, 16
    %v1835 = vrot.slane %v1833, 7
    %v1836 = vshll.u32 %v1809, 16
    %v1838 = vor.u32 %v1835, %v1836
    %v1839 = vrot.slane %v1835, 4
    %v1841 = vshrl.u32 %v1810, 16
    %v1843 = vrot.slane %v1841, 7
    %v1844 = vshll.u32 %v1810, 16
    %v1846 = vor.u32 %v1843, %v1844
    %v1847 = vsel %vm108, %v1839, %v1846
    %v1848 = vrot.slane %v1843, 4
    %v1850 = vshrl.u32 %v1811, 16
    %v1852 = vrot.slane %v1850, 7
    %v1853 = vshll.u32 %v1811, 16
    %v1855 = vor.u32 %v1852, %v1853
    %v1856 = vrot.slane %v1852, 4
    %v1858 = vshrl.u32 %v1812, 16
    %v1860 = vrot.slane %v1858, 7
    %v1861 = vshll.u32 %v1812, 16
    %v1863 = vor.u32 %v1860, %v1861
    %v1864 = vsel %vm108, %v1856, %v1863
    %v1865 = vrot.slane %v1860, 4
    %v1867 = vshrl.u32 %v1813, 16
    %v1869 = vrot.slane %v1867, 7
    %v1870 = vshll.u32 %v1813, 16
    %v1872 = vor.u32 %v1869, %v1870
    %v1873 = vrot.slane %v1869, 4
    %v1875 = vshrl.u32 %v1814, 16
    %v1877 = vrot.slane %v1875, 7
    %v1878 = vshll.u32 %v1814, 16
    %v1880 = vor.u32 %v1877, %v1878
    %v1881 = vsel %vm108, %v1873, %v1880
    %v1882 = vrot.slane %v1877, 4
    %vm1895 = vcmask 1047556
    %vm1896 = vmand %vm1895, %vm52
    %vm1897 = vmor %vm1896, %vm945
    %v1898 = vld [vmem:[#allocation2] sm:$0xff]
    %v1899 = vsel %vm1897, %v1821, %v1898
    %1900 = vst [vmem:[#allocation2] sm:$0xff] %v1899
    %1901 = vst [vmem:[#allocation2 + $0x8] sm:$0xff] %v1830
    %v1902 = vld [vmem:[#allocation2 + $0x10] sm:$0x11]
    %v1903 = vsel %vm37, %v1831, %v1902
    %1904 = vst [vmem:[#allocation2 + $0x10] sm:$0x11] %v1903
    %v1905 = vld [vmem:[#allocation2 + $0x18] sm:$0xff]
    %v1906 = vsel %vm1897, %v1838, %v1905
    %1907 = vst [vmem:[#allocation2 + $0x18] sm:$0xff] %v1906
    %1908 = vst [vmem:[#allocation2 + $0x20] sm:$0xff] %v1847
    %v1909 = vld [vmem:[#allocation2 + $0x28] sm:$0x11]
    %v1910 = vsel %vm37, %v1848, %v1909
    %1911 = vst [vmem:[#allocation2 + $0x28] sm:$0x11] %v1910
    %v1912 = vld [vmem:[#allocation2 + $0x30] sm:$0xff]
    %v1913 = vsel %vm1897, %v1855, %v1912
    %1914 = vst [vmem:[#allocation2 + $0x30] sm:$0xff] %v1913
    %1915 = vst [vmem:[#allocation2 + $0x38] sm:$0xff] %v1864
    %v1916 = vld [vmem:[#allocation2 + $0x40] sm:$0x11]
    %v1917 = vsel %vm37, %v1865, %v1916
    %1918 = vst [vmem:[#allocation2 + $0x40] sm:$0x11] %v1917
    %v1919 = vld [vmem:[#allocation2 + $0x48] sm:$0xff]
    %v1920 = vsel %vm1897, %v1872, %v1919
    %1921 = vst [vmem:[#allocation2 + $0x48] sm:$0xff] %v1920
    %1922 = vst [vmem:[#allocation2 + $0x50] sm:$0xff] %v1881
    %v1923 = vld [vmem:[#allocation2 + $0x58] sm:$0x11]
    %v1924 = vsel %vm37, %v1882, %v1923
    %1925 = vst [vmem:[#allocation2 + $0x58] sm:$0x11] %v1924
    %v1926 = vld [vmem:[%s7] sm:$0x3]
    %v1928 = vlaneseq
    %v1929 = vshrl.u32 %v1928, 7
    %v1930 = vsub.s32 0, %v1929
    %v1931 = vrot.slane %v1926, %v1930
    %v1932 = vlaneseq
    %v1933 = vshrl.u32 %v1932, 7
    %v1934 = vsub.s32 1, %v1933
    %v1935 = vrot.slane %v1926, %v1934
    %v1938 = vld [vmem:[#allocation2] sm:$0xff]
    %v1939 = vld [vmem:[#allocation2 + $0x8] sm:$0xff]
    %v1940 = vld [vmem:[#allocation2 + $0x18] sm:$0xff]
    %v1941 = vld [vmem:[#allocation2 + $0x20] sm:$0xff]
    %v1942 = vld [vmem:[#allocation2 + $0x30] sm:$0xff]
    %v1943 = vld [vmem:[#allocation2 + $0x38] sm:$0xff]
    %v1944 = vld [vmem:[#allocation2 + $0x48] sm:$0xff]
    %v1945 = vld [vmem:[#allocation2 + $0x50] sm:$0xff]
    %v1946 = vld [vmem:[%s4] sm:$0xff]
    %v1947 = vld [vmem:[%s4 + $0x8] sm:$0xff]
    %v1948 = vld [vmem:[%s4 + $0x10] sm:$0xff]
    %v1949 = vld [vmem:[%s4 + $0x18] sm:$0xff]
    %v1950 = vld [vmem:[%s4 + $0x20] sm:$0xff]
    %v1951 = vld [vmem:[%s4 + $0x28] sm:$0xff]
    %v1952 = vld [vmem:[%s4 + $0x30] sm:$0xff]
    %v1953 = vld [vmem:[%s4 + $0x38] sm:$0xff]
    %v1954 = vld [vmem:[%s4 + $0x40] sm:$0xff]
    %v1955 = vld [vmem:[%s4 + $0x48] sm:$0xff]
    %v1956 = vld [vmem:[%s4 + $0x50] sm:$0xff]
    %v1957 = vld [vmem:[%s4 + $0x58] sm:$0xff]
    %v1958 = vld [vmem:[%s4 + $0x60] sm:$0xff]
    %v1959 = vld [vmem:[%s4 + $0x68] sm:$0xff]
    %v1960 = vld [vmem:[%s4 + $0x70] sm:$0xff]
    %v1961 = vld [vmem:[%s4 + $0x78] sm:$0xff]
    %v1962 = vld [vmem:[%s4 + $0x80] sm:$0xff]
    %v1963 = vld [vmem:[%s4 + $0x88] sm:$0xff]
    %v1964 = vld [vmem:[%s4 + $0x90] sm:$0xff]
    %v1965 = vld [vmem:[%s4 + $0x98] sm:$0xff]
    %v1966 = vld [vmem:[%s4 + $0xa0] sm:$0xff]
    %v1967 = vld [vmem:[%s4 + $0xa8] sm:$0xff]
    %v1968 = vld [vmem:[%s4 + $0xb0] sm:$0xff]
    %v1969 = vld [vmem:[%s4 + $0xb8] sm:$0xff]
    %v1970 = vld [vmem:[%s4 + $0xc0] sm:$0xff]
    %v1971 = vld [vmem:[%s4 + $0xc8] sm:$0xff]
    %v1972 = vld [vmem:[%s4 + $0xd0] sm:$0xff]
    %v1973 = vld [vmem:[%s4 + $0xd8] sm:$0xff]
    %v1974 = vld [vmem:[%s4 + $0xe0] sm:$0xff]
    %v1975 = vld [vmem:[%s4 + $0xe8] sm:$0xff]
    %v1976 = vld [vmem:[%s4 + $0xf0] sm:$0xff]
    %v1977 = vld [vmem:[%s4 + $0xf8] sm:$0xff]
    %v1986 = vunpack.c.l.b16 %v1938
    %v1987 = vunpack.c.h.b16 %v1938
    %v1988 = vunpack.c.l.b16 %v1939
    %v1989 = vunpack.c.h.b16 %v1939
    %v1990 = vunpack.c.l.b16 %v1940
    %v1991 = vunpack.c.h.b16 %v1940
    %v1992 = vunpack.c.l.b16 %v1941
    %v1993 = vunpack.c.h.b16 %v1941
    %v1994 = vunpack.c.l.b16 %v1942
    %v1995 = vunpack.c.h.b16 %v1942
    %v1996 = vunpack.c.l.b16 %v1943
    %v1997 = vunpack.c.h.b16 %v1943
    %v1998 = vunpack.c.l.b16 %v1944
    %v1999 = vunpack.c.h.b16 %v1944
    %v2000 = vunpack.c.l.b16 %v1945
    %v2001 = vunpack.c.h.b16 %v1945
    %v2002 = vpack.c.b16 %v1988, %v1986
    %v2003 = vpack.c.b16 %v1989, %v1987
    %v2004 = vpack.c.b16 %v1992, %v1990
    %v2005 = vpack.c.b16 %v1993, %v1991
    %v2006 = vpack.c.b16 %v1996, %v1994
    %v2007 = vpack.c.b16 %v1997, %v1995
    %v2008 = vpack.c.b16 %v2000, %v1998
    %v2009 = vpack.c.b16 %v2001, %v1999
    %v2050 = vunpack.c.l.b16 %v1946
    %v2051 = vunpack.c.h.b16 %v1946
    %v2052 = vunpack.c.l.b16 %v1947
    %v2053 = vunpack.c.h.b16 %v1947
    %v2054 = vunpack.c.l.b16 %v1948
    %v2055 = vunpack.c.h.b16 %v1948
    %v2056 = vunpack.c.l.b16 %v1949
    %v2057 = vunpack.c.h.b16 %v1949
    %v2058 = vunpack.c.l.b16 %v1950
    %v2059 = vunpack.c.h.b16 %v1950
    %v2060 = vunpack.c.l.b16 %v1951
    %v2061 = vunpack.c.h.b16 %v1951
    %v2062 = vunpack.c.l.b16 %v1952
    %v2063 = vunpack.c.h.b16 %v1952
    %v2064 = vunpack.c.l.b16 %v1953
    %v2065 = vunpack.c.h.b16 %v1953
    %v2066 = vunpack.c.l.b16 %v1954
    %v2067 = vunpack.c.h.b16 %v1954
    %v2068 = vunpack.c.l.b16 %v1955
    %v2069 = vunpack.c.h.b16 %v1955
    %v2070 = vunpack.c.l.b16 %v1956
    %v2071 = vunpack.c.h.b16 %v1956
    %v2072 = vunpack.c.l.b16 %v1957
    %v2073 = vunpack.c.h.b16 %v1957
    %v2074 = vunpack.c.l.b16 %v1958
    %v2075 = vunpack.c.h.b16 %v1958
    %v2076 = vunpack.c.l.b16 %v1959
    %v2077 = vunpack.c.h.b16 %v1959
    %v2078 = vunpack.c.l.b16 %v1960
    %v2079 = vunpack.c.h.b16 %v1960
    %v2080 = vunpack.c.l.b16 %v1961
    %v2081 = vunpack.c.h.b16 %v1961
    %v2082 = vunpack.c.l.b16 %v1962
    %v2083 = vunpack.c.h.b16 %v1962
    %v2084 = vunpack.c.l.b16 %v1963
    %v2085 = vunpack.c.h.b16 %v1963
    %v2086 = vunpack.c.l.b16 %v1964
    %v2087 = vunpack.c.h.b16 %v1964
    %v2088 = vunpack.c.l.b16 %v1965
    %v2089 = vunpack.c.h.b16 %v1965
    %v2090 = vunpack.c.l.b16 %v1966
    %v2091 = vunpack.c.h.b16 %v1966
    %v2092 = vunpack.c.l.b16 %v1967
    %v2093 = vunpack.c.h.b16 %v1967
    %v2094 = vunpack.c.l.b16 %v1968
    %v2095 = vunpack.c.h.b16 %v1968
    %v2096 = vunpack.c.l.b16 %v1969
    %v2097 = vunpack.c.h.b16 %v1969
    %v2098 = vunpack.c.l.b16 %v1970
    %v2099 = vunpack.c.h.b16 %v1970
    %v2100 = vunpack.c.l.b16 %v1971
    %v2101 = vunpack.c.h.b16 %v1971
    %v2102 = vunpack.c.l.b16 %v1972
    %v2103 = vunpack.c.h.b16 %v1972
    %v2104 = vunpack.c.l.b16 %v1973
    %v2105 = vunpack.c.h.b16 %v1973
    %v2106 = vunpack.c.l.b16 %v1974
    %v2107 = vunpack.c.h.b16 %v1974
    %v2108 = vunpack.c.l.b16 %v1975
    %v2109 = vunpack.c.h.b16 %v1975
    %v2110 = vunpack.c.l.b16 %v1976
    %v2111 = vunpack.c.h.b16 %v1976
    %v2112 = vunpack.c.l.b16 %v1977
    %v2113 = vunpack.c.h.b16 %v1977
    %v2114 = vpack.c.b16 %v2052, %v2050
    %v2115 = vpack.c.b16 %v2053, %v2051
    %v2116 = vpack.c.b16 %v2056, %v2054
    %v2117 = vpack.c.b16 %v2057, %v2055
    %v2118 = vpack.c.b16 %v2060, %v2058
    %v2119 = vpack.c.b16 %v2061, %v2059
    %v2120 = vpack.c.b16 %v2064, %v2062
    %v2121 = vpack.c.b16 %v2065, %v2063
    %v2122 = vpack.c.b16 %v2068, %v2066
    %v2123 = vpack.c.b16 %v2069, %v2067
    %v2124 = vpack.c.b16 %v2072, %v2070
    %v2125 = vpack.c.b16 %v2073, %v2071
    %v2126 = vpack.c.b16 %v2076, %v2074
    %v2127 = vpack.c.b16 %v2077, %v2075
    %v2128 = vpack.c.b16 %v2080, %v2078
    %v2129 = vpack.c.b16 %v2081, %v2079
    %v2130 = vpack.c.b16 %v2084, %v2082
    %v2131 = vpack.c.b16 %v2085, %v2083
    %v2132 = vpack.c.b16 %v2088, %v2086
    %v2133 = vpack.c.b16 %v2089, %v2087
    %v2134 = vpack.c.b16 %v2092, %v2090
    %v2135 = vpack.c.b16 %v2093, %v2091
    %v2136 = vpack.c.b16 %v2096, %v2094
    %v2137 = vpack.c.b16 %v2097, %v2095
    %v2138 = vpack.c.b16 %v2100, %v2098
    %v2139 = vpack.c.b16 %v2101, %v2099
    %v2140 = vpack.c.b16 %v2104, %v2102
    %v2141 = vpack.c.b16 %v2105, %v2103
    %v2142 = vpack.c.b16 %v2108, %v2106
    %v2143 = vpack.c.b16 %v2109, %v2107
    %v2144 = vpack.c.b16 %v2112, %v2110
    %v2145 = vpack.c.b16 %v2113, %v2111
    %2178 = vmatprep.subr.bf16.mxu0 %v2115
    %2179 = vmatpush1.bf16.msra.mxu0 %v2114
    %2180 = vmatprep.subr.bf16.mxu0 %v2117
    %2181 = vmatpush1.bf16.msra.mxu0 %v2116
    %2182 = vmatprep.subr.bf16.mxu0 %v2119
    %2183 = vmatpush1.bf16.msra.mxu0 %v2118
    %2184 = vmatprep.subr.bf16.mxu0 %v2121
    %2185 = vmatpush1.bf16.msra.mxu0 %v2120
    %2186 = vmatprep.subr.bf16.mxu0 %v2123
    %2187 = vmatpush1.bf16.msra.mxu0 %v2122
    %2188 = vmatprep.subr.bf16.mxu0 %v2125
    %2189 = vmatpush1.bf16.msra.mxu0 %v2124
    %2190 = vmatprep.subr.bf16.mxu0 %v2127
    %2191 = vmatpush1.bf16.msra.mxu0 %v2126
    %2192 = vmatprep.subr.bf16.mxu0 %v2129
    %2193 = vmatpush1.bf16.msra.mxu0 %v2128
    %2194 = vmatprep.subr.bf16.mxu0 %v2131
    %2195 = vmatpush1.bf16.msra.mxu0 %v2130
    %2196 = vmatprep.subr.bf16.mxu0 %v2133
    %2197 = vmatpush1.bf16.msra.mxu0 %v2132
    %2198 = vmatprep.subr.bf16.mxu0 %v2135
    %2199 = vmatpush1.bf16.msra.mxu0 %v2134
    %2200 = vmatprep.subr.bf16.mxu0 %v2137
    %2201 = vmatpush1.bf16.msra.mxu0 %v2136
    %2202 = vmatprep.subr.bf16.mxu0 %v2139
    %2203 = vmatpush1.bf16.msra.mxu0 %v2138
    %2204 = vmatprep.subr.bf16.mxu0 %v2141
    %2205 = vmatpush1.bf16.msra.mxu0 %v2140
    %2206 = vmatprep.subr.bf16.mxu0 %v2143
    %2207 = vmatpush1.bf16.msra.mxu0 %v2142
    %2208 = vmatprep.subr.bf16.mxu0 %v2145
    %2209 = vmatpush1.bf16.msra.mxu0 %v2144
    %2210 = vmatprep.mubr.bf16.mxu0 %v2003
    %2211 = vmatmul.mubr.bf16.gmra.mrb[0].mxu0 %v2002
    %v2212 = vpop.f32.mrb[0].mxu0
    %v2213 = vadd.f32 0.0, %v2212
    %v2214 = vpop.f32.mrb[0].mxu0
    %v2215 = vadd.f32 0.0, %v2214
    %v2216 = vpop.f32.mrb[0].mxu0
    %v2217 = vadd.f32 0.0, %v2216
    %v2218 = vpop.f32.mrb[0].mxu0
    %v2219 = vadd.f32 0.0, %v2218
    %2220 = vmatprep.mubr.bf16.mxu0 %v2005
    %2221 = vmatmul.mubr.bf16.gmra.mrb[0].mxu0 %v2004
    %v2222 = vpop.f32.mrb[0].mxu0
    %v2223 = vadd.f32 0.0, %v2222
    %v2224 = vpop.f32.mrb[0].mxu0
    %v2225 = vadd.f32 0.0, %v2224
    %v2226 = vpop.f32.mrb[0].mxu0
    %v2227 = vadd.f32 0.0, %v2226
    %v2228 = vpop.f32.mrb[0].mxu0
    %v2229 = vadd.f32 0.0, %v2228
    %2230 = vmatprep.mubr.bf16.mxu0 %v2007
    %2231 = vmatmul.mubr.bf16.gmra.mrb[0].mxu0 %v2006
    %v2232 = vpop.f32.mrb[0].mxu0
    %v2233 = vadd.f32 0.0, %v2232
    %v2234 = vpop.f32.mrb[0].mxu0
    %v2235 = vadd.f32 0.0, %v2234
    %v2236 = vpop.f32.mrb[0].mxu0
    %v2237 = vadd.f32 0.0, %v2236
    %v2238 = vpop.f32.mrb[0].mxu0
    %v2239 = vadd.f32 0.0, %v2238
    %2240 = vmatprep.mubr.bf16.mxu0 %v2009
    %2241 = vmatmul.mubr.bf16.gmra.mrb[0].mxu0 %v2008
    %v2242 = vpop.f32.mrb[0].mxu0
    %v2243 = vadd.f32 0.0, %v2242
    %v2244 = vpop.f32.mrb[0].mxu0
    %v2245 = vadd.f32 0.0, %v2244
    %v2246 = vpop.f32.mrb[0].mxu0
    %v2247 = vadd.f32 0.0, %v2246
    %v2248 = vpop.f32.mrb[0].mxu0
    %v2249 = vadd.f32 0.0, %v2248
    %2250 = vdwg.mxu0
    %v2251 = vadd.f32 %v1931, %v2213
    %v2252 = vadd.f32 %v1935, %v2215
    %v2253 = vadd.f32 %v1931, %v2217
    %v2254 = vadd.f32 %v1935, %v2219
    %v2255 = vadd.f32 %v1931, %v2223
    %v2256 = vadd.f32 %v1935, %v2225
    %v2257 = vadd.f32 %v1931, %v2227
    %v2258 = vadd.f32 %v1935, %v2229
    %v2259 = vadd.f32 %v1931, %v2233
    %v2260 = vadd.f32 %v1935, %v2235
    %v2261 = vadd.f32 %v1931, %v2237
    %v2262 = vadd.f32 %v1935, %v2239
    %v2263 = vadd.f32 %v1931, %v2243
    %v2264 = vadd.f32 %v1935, %v2245
    %v2265 = vadd.f32 %v1931, %v2247
    %v2266 = vadd.f32 %v1935, %v2249
    %v2267 = vld [vmem:[#allocation2] sm:$0xff]
    %v2268 = vld [vmem:[#allocation2 + $0x8] sm:$0xff]
    %v2269 = vld [vmem:[#allocation2 + $0x10] sm:$0x11]
    %v2270 = vld [vmem:[#allocation2 + $0x18] sm:$0xff]
    %v2271 = vld [vmem:[#allocation2 + $0x20] sm:$0xff]
    %v2272 = vld [vmem:[#allocation2 + $0x28] sm:$0x11]
    %v2273 = vld [vmem:[#allocation2 + $0x30] sm:$0xff]
    %v2274 = vld [vmem:[#allocation2 + $0x38] sm:$0xff]
    %v2275 = vld [vmem:[#allocation2 + $0x40] sm:$0x11]
    %v2276 = vld [vmem:[#allocation2 + $0x48] sm:$0xff]
    %v2277 = vld [vmem:[#allocation2 + $0x50] sm:$0xff]
    %v2278 = vld [vmem:[#allocation2 + $0x58] sm:$0x11]
    %v2280 = vshrl.u32 %v2267, 16
    %v2282 = vrot.slane %v2280, 4
    %v2283 = vshll.u32 %v2267, 16
    %v2285 = vrot.slane %v2283, 5
    %v2286 = vor.u32 %v2282, %v2285
    %v2287 = vrot.slane %v2286, 4
    %v2289 = vshll.u32 %v2268, 16
    %v2291 = vrot.slane %v2289, 5
    %v2292 = vsel %vm406, %v2287, %v2291
    %v2293 = vshrl.u32 %v2268, 16
    %v2295 = vrot.slane %v2293, 4
    %v2296 = vor.u32 %v2295, %v2291
    %v2297 = vrot.slane %v2296, 4
    %v2299 = vshll.u32 %v2269, 16
    %v2301 = vrot.slane %v2299, 5
    %v2302 = vsel %vm406, %v2297, %v2301
    %v2304 = vshrl.u32 %v2270, 16
    %v2306 = vrot.slane %v2304, 4
    %v2307 = vshll.u32 %v2270, 16
    %v2309 = vrot.slane %v2307, 5
    %v2310 = vor.u32 %v2306, %v2309
    %v2311 = vrot.slane %v2310, 4
    %v2313 = vshll.u32 %v2271, 16
    %v2315 = vrot.slane %v2313, 5
    %v2316 = vsel %vm406, %v2311, %v2315
    %v2317 = vshrl.u32 %v2271, 16
    %v2319 = vrot.slane %v2317, 4
    %v2320 = vor.u32 %v2319, %v2315
    %v2321 = vrot.slane %v2320, 4
    %v2323 = vshll.u32 %v2272, 16
    %v2325 = vrot.slane %v2323, 5
    %v2326 = vsel %vm406, %v2321, %v2325
    %v2328 = vshrl.u32 %v2273, 16
    %v2330 = vrot.slane %v2328, 4
    %v2331 = vshll.u32 %v2273, 16
    %v2333 = vrot.slane %v2331, 5
    %v2334 = vor.u32 %v2330, %v2333
    %v2335 = vrot.slane %v2334, 4
    %v2337 = vshll.u32 %v2274, 16
    %v2339 = vrot.slane %v2337, 5
    %v2340 = vsel %vm406, %v2335, %v2339
    %v2341 = vshrl.u32 %v2274, 16
    %v2343 = vrot.slane %v2341, 4
    %v2344 = vor.u32 %v2343, %v2339
    %v2345 = vrot.slane %v2344, 4
    %v2347 = vshll.u32 %v2275, 16
    %v2349 = vrot.slane %v2347, 5
    %v2350 = vsel %vm406, %v2345, %v2349
    %v2352 = vshrl.u32 %v2276, 16
    %v2354 = vrot.slane %v2352, 4
    %v2355 = vshll.u32 %v2276, 16
    %v2357 = vrot.slane %v2355, 5
    %v2358 = vor.u32 %v2354, %v2357
    %v2359 = vrot.slane %v2358, 4
    %v2361 = vshll.u32 %v2277, 16
    %v2363 = vrot.slane %v2361, 5
    %v2364 = vsel %vm406, %v2359, %v2363
    %v2365 = vshrl.u32 %v2277, 16
    %v2367 = vrot.slane %v2365, 4
    %v2368 = vor.u32 %v2367, %v2363
    %v2369 = vrot.slane %v2368, 4
    %v2371 = vshll.u32 %v2278, 16
    %v2373 = vrot.slane %v2371, 5
    %v2374 = vsel %vm406, %v2369, %v2373
    %s2375 = scalar_lea.vmem %s4, 256
    %v2376 = vld [vmem:[%s2375] sm:$0xff]
    %v2377 = vld [vmem:[%s2375 + $0x8] sm:$0xff]
    %v2378 = vld [vmem:[%s2375 + $0x10] sm:$0xff]
    %v2379 = vld [vmem:[%s2375 + $0x18] sm:$0xff]
    %v2380 = vld [vmem:[%s2375 + $0x20] sm:$0xff]
    %v2381 = vld [vmem:[%s2375 + $0x28] sm:$0xff]
    %v2382 = vld [vmem:[%s2375 + $0x30] sm:$0xff]
    %v2383 = vld [vmem:[%s2375 + $0x38] sm:$0xff]
    %v2384 = vld [vmem:[%s2375 + $0x40] sm:$0xff]
    %v2385 = vld [vmem:[%s2375 + $0x48] sm:$0xff]
    %v2386 = vld [vmem:[%s2375 + $0x50] sm:$0xff]
    %v2387 = vld [vmem:[%s2375 + $0x58] sm:$0xff]
    %v2388 = vld [vmem:[%s2375 + $0x60] sm:$0xff]
    %v2389 = vld [vmem:[%s2375 + $0x68] sm:$0xff]
    %v2390 = vld [vmem:[%s2375 + $0x70] sm:$0xff]
    %v2391 = vld [vmem:[%s2375 + $0x78] sm:$0xff]
    %v2392 = vld [vmem:[%s2375 + $0x80] sm:$0xff]
    %v2393 = vld [vmem:[%s2375 + $0x88] sm:$0xff]
    %v2394 = vld [vmem:[%s2375 + $0x90] sm:$0xff]
    %v2395 = vld [vmem:[%s2375 + $0x98] sm:$0xff]
    %v2396 = vld [vmem:[%s2375 + $0xa0] sm:$0xff]
    %v2397 = vld [vmem:[%s2375 + $0xa8] sm:$0xff]
    %v2398 = vld [vmem:[%s2375 + $0xb0] sm:$0xff]
    %v2399 = vld [vmem:[%s2375 + $0xb8] sm:$0xff]
    %v2400 = vld [vmem:[%s2375 + $0xc0] sm:$0xff]
    %v2401 = vld [vmem:[%s2375 + $0xc8] sm:$0xff]
    %v2402 = vld [vmem:[%s2375 + $0xd0] sm:$0xff]
    %v2403 = vld [vmem:[%s2375 + $0xd8] sm:$0xff]
    %v2404 = vld [vmem:[%s2375 + $0xe0] sm:$0xff]
    %v2405 = vld [vmem:[%s2375 + $0xe8] sm:$0xff]
    %v2406 = vld [vmem:[%s2375 + $0xf0] sm:$0xff]
    %v2407 = vld [vmem:[%s2375 + $0xf8] sm:$0xff]
    %v2408 = vunpack.c.l.b16 %v2292
    %v2409 = vunpack.c.h.b16 %v2292
    %v2410 = vunpack.c.l.b16 %v2302
    %v2411 = vunpack.c.h.b16 %v2302
    %v2412 = vunpack.c.l.b16 %v2316
    %v2413 = vunpack.c.h.b16 %v2316
    %v2414 = vunpack.c.l.b16 %v2326
    %v2415 = vunpack.c.h.b16 %v2326
    %v2416 = vunpack.c.l.b16 %v2340
    %v2417 = vunpack.c.h.b16 %v2340
    %v2418 = vunpack.c.l.b16 %v2350
    %v2419 = vunpack.c.h.b16 %v2350
    %v2420 = vunpack.c.l.b16 %v2364
    %v2421 = vunpack.c.h.b16 %v2364
    %v2422 = vunpack.c.l.b16 %v2374
    %v2423 = vunpack.c.h.b16 %v2374
    %v2424 = vpack.c.b16 %v2410, %v2408
    %v2425 = vpack.c.b16 %v2411, %v2409
    %v2426 = vpack.c.b16 %v2414, %v2412
    %v2427 = vpack.c.b16 %v2415, %v2413
    %v2428 = vpack.c.b16 %v2418, %v2416
    %v2429 = vpack.c.b16 %v2419, %v2417
    %v2430 = vpack.c.b16 %v2422, %v2420
    %v2431 = vpack.c.b16 %v2423, %v2421
    %v2472 = vunpack.c.l.b16 %v2376
    %v2473 = vunpack.c.h.b16 %v2376
    %v2474 = vunpack.c.l.b16 %v2377
    %v2475 = vunpack.c.h.b16 %v2377
    %v2476 = vunpack.c.l.b16 %v2378
    %v2477 = vunpack.c.h.b16 %v2378
    %v2478 = vunpack.c.l.b16 %v2379
    %v2479 = vunpack.c.h.b16 %v2379
    %v2480 = vunpack.c.l.b16 %v2380
    %v2481 = vunpack.c.h.b16 %v2380
    %v2482 = vunpack.c.l.b16 %v2381
    %v2483 = vunpack.c.h.b16 %v2381
    %v2484 = vunpack.c.l.b16 %v2382
    %v2485 = vunpack.c.h.b16 %v2382
    %v2486 = vunpack.c.l.b16 %v2383
    %v2487 = vunpack.c.h.b16 %v2383
    %v2488 = vunpack.c.l.b16 %v2384
    %v2489 = vunpack.c.h.b16 %v2384
    %v2490 = vunpack.c.l.b16 %v2385
    %v2491 = vunpack.c.h.b16 %v2385
    %v2492 = vunpack.c.l.b16 %v2386
    %v2493 = vunpack.c.h.b16 %v2386
    %v2494 = vunpack.c.l.b16 %v2387
    %v2495 = vunpack.c.h.b16 %v2387
    %v2496 = vunpack.c.l.b16 %v2388
    %v2497 = vunpack.c.h.b16 %v2388
    %v2498 = vunpack.c.l.b16 %v2389
    %v2499 = vunpack.c.h.b16 %v2389
    %v2500 = vunpack.c.l.b16 %v2390
    %v2501 = vunpack.c.h.b16 %v2390
    %v2502 = vunpack.c.l.b16 %v2391
    %v2503 = vunpack.c.h.b16 %v2391
    %v2504 = vunpack.c.l.b16 %v2392
    %v2505 = vunpack.c.h.b16 %v2392
    %v2506 = vunpack.c.l.b16 %v2393
    %v2507 = vunpack.c.h.b16 %v2393
    %v2508 = vunpack.c.l.b16 %v2394
    %v2509 = vunpack.c.h.b16 %v2394
    %v2510 = vunpack.c.l.b16 %v2395
    %v2511 = vunpack.c.h.b16 %v2395
    %v2512 = vunpack.c.l.b16 %v2396
    %v2513 = vunpack.c.h.b16 %v2396
    %v2514 = vunpack.c.l.b16 %v2397
    %v2515 = vunpack.c.h.b16 %v2397
    %v2516 = vunpack.c.l.b16 %v2398
    %v2517 = vunpack.c.h.b16 %v2398
    %v2518 = vunpack.c.l.b16 %v2399
    %v2519 = vunpack.c.h.b16 %v2399
    %v2520 = vunpack.c.l.b16 %v2400
    %v2521 = vunpack.c.h.b16 %v2400
    %v2522 = vunpack.c.l.b16 %v2401
    %v2523 = vunpack.c.h.b16 %v2401
    %v2524 = vunpack.c.l.b16 %v2402
    %v2525 = vunpack.c.h.b16 %v2402
    %v2526 = vunpack.c.l.b16 %v2403
    %v2527 = vunpack.c.h.b16 %v2403
    %v2528 = vunpack.c.l.b16 %v2404
    %v2529 = vunpack.c.h.b16 %v2404
    %v2530 = vunpack.c.l.b16 %v2405
    %v2531 = vunpack.c.h.b16 %v2405
    %v2532 = vunpack.c.l.b16 %v2406
    %v2533 = vunpack.c.h.b16 %v2406
    %v2534 = vunpack.c.l.b16 %v2407
    %v2535 = vunpack.c.h.b16 %v2407
    %v2536 = vpack.c.b16 %v2474, %v2472
    %v2537 = vpack.c.b16 %v2475, %v2473
    %v2538 = vpack.c.b16 %v2478, %v2476
    %v2539 = vpack.c.b16 %v2479, %v2477
    %v2540 = vpack.c.b16 %v2482, %v2480
    %v2541 = vpack.c.b16 %v2483, %v2481
    %v2542 = vpack.c.b16 %v2486, %v2484
    %v2543 = vpack.c.b16 %v2487, %v2485
    %v2544 = vpack.c.b16 %v2490, %v2488
    %v2545 = vpack.c.b16 %v2491, %v2489
    %v2546 = vpack.c.b16 %v2494, %v2492
    %v2547 = vpack.c.b16 %v2495, %v2493
    %v2548 = vpack.c.b16 %v2498, %v2496
    %v2549 = vpack.c.b16 %v2499, %v2497
    %v2550 = vpack.c.b16 %v2502, %v2500
    %v2551 = vpack.c.b16 %v2503, %v2501
    %v2552 = vpack.c.b16 %v2506, %v2504
    %v2553 = vpack.c.b16 %v2507, %v2505
    %v2554 = vpack.c.b16 %v2510, %v2508
    %v2555 = vpack.c.b16 %v2511, %v2509
    %v2556 = vpack.c.b16 %v2514, %v2512
    %v2557 = vpack.c.b16 %v2515, %v2513
    %v2558 = vpack.c.b16 %v2518, %v2516
    %v2559 = vpack.c.b16 %v2519, %v2517
    %v2560 = vpack.c.b16 %v2522, %v2520
    %v2561 = vpack.c.b16 %v2523, %v2521
    %v2562 = vpack.c.b16 %v2526, %v2524
    %v2563 = vpack.c.b16 %v2527, %v2525
    %v2564 = vpack.c.b16 %v2530, %v2528
    %v2565 = vpack.c.b16 %v2531, %v2529
    %v2566 = vpack.c.b16 %v2534, %v2532
    %v2567 = vpack.c.b16 %v2535, %v2533
    %2600 = vmatprep.subr.bf16.mxu0 %v2537
    %2601 = vmatpush1.bf16.msra.mxu0 %v2536
    %2602 = vmatprep.subr.bf16.mxu0 %v2539
    %2603 = vmatpush1.bf16.msra.mxu0 %v2538
    %2604 = vmatprep.subr.bf16.mxu0 %v2541
    %2605 = vmatpush1.bf16.msra.mxu0 %v2540
    %2606 = vmatprep.subr.bf16.mxu0 %v2543
    %2607 = vmatpush1.bf16.msra.mxu0 %v2542
    %2608 = vmatprep.subr.bf16.mxu0 %v2545
    %2609 = vmatpush1.bf16.msra.mxu0 %v2544
    %2610 = vmatprep.subr.bf16.mxu0 %v2547
    %2611 = vmatpush1.bf16.msra.mxu0 %v2546
    %2612 = vmatprep.subr.bf16.mxu0 %v2549
    %2613 = vmatpush1.bf16.msra.mxu0 %v2548
    %2614 = vmatprep.subr.bf16.mxu0 %v2551
    %2615 = vmatpush1.bf16.msra.mxu0 %v2550
    %2616 = vmatprep.subr.bf16.mxu0 %v2553
    %2617 = vmatpush1.bf16.msra.mxu0 %v2552
    %2618 = vmatprep.subr.bf16.mxu0 %v2555
    %2619 = vmatpush1.bf16.msra.mxu0 %v2554
    %2620 = vmatprep.subr.bf16.mxu0 %v2557
    %2621 = vmatpush1.bf16.msra.mxu0 %v2556
    %2622 = vmatprep.subr.bf16.mxu0 %v2559
    %2623 = vmatpush1.bf16.msra.mxu0 %v2558
    %2624 = vmatprep.subr.bf16.mxu0 %v2561
    %2625 = vmatpush1.bf16.msra.mxu0 %v2560
    %2626 = vmatprep.subr.bf16.mxu0 %v2563
    %2627 = vmatpush1.bf16.msra.mxu0 %v2562
    %2628 = vmatprep.subr.bf16.mxu0 %v2565
    %2629 = vmatpush1.bf16.msra.mxu0 %v2564
    %2630 = vmatprep.subr.bf16.mxu0 %v2567
    %2631 = vmatpush1.bf16.msra.mxu0 %v2566
    %2632 = vmatprep.mubr.bf16.mxu0 %v2425
    %2633 = vmatmul.mubr.bf16.gmra.mrb[0].mxu0 %v2424
    %v2634 = vpop.f32.mrb[0].mxu0
    %v2635 = vadd.f32 0.0, %v2634
    %v2636 = vpop.f32.mrb[0].mxu0
    %v2637 = vadd.f32 0.0, %v2636
    %v2638 = vpop.f32.mrb[0].mxu0
    %v2639 = vadd.f32 0.0, %v2638
    %v2640 = vpop.f32.mrb[0].mxu0
    %v2641 = vadd.f32 0.0, %v2640
    %2642 = vmatprep.mubr.bf16.mxu0 %v2427
    %2643 = vmatmul.mubr.bf16.gmra.mrb[0].mxu0 %v2426
    %v2644 = vpop.f32.mrb[0].mxu0
    %v2645 = vadd.f32 0.0, %v2644
    %v2646 = vpop.f32.mrb[0].mxu0
    %v2647 = vadd.f32 0.0, %v2646
    %v2648 = vpop.f32.mrb[0].mxu0
    %v2649 = vadd.f32 0.0, %v2648
    %v2650 = vpop.f32.mrb[0].mxu0
    %v2651 = vadd.f32 0.0, %v2650
    %2652 = vmatprep.mubr.bf16.mxu0 %v2429
    %2653 = vmatmul.mubr.bf16.gmra.mrb[0].mxu0 %v2428
    %v2654 = vpop.f32.mrb[0].mxu0
    %v2655 = vadd.f32 0.0, %v2654
    %v2656 = vpop.f32.mrb[0].mxu0
    %v2657 = vadd.f32 0.0, %v2656
    %v2658 = vpop.f32.mrb[0].mxu0
    %v2659 = vadd.f32 0.0, %v2658
    %v2660 = vpop.f32.mrb[0].mxu0
    %v2661 = vadd.f32 0.0, %v2660
    %2662 = vmatprep.mubr.bf16.mxu0 %v2431
    %2663 = vmatmul.mubr.bf16.gmra.mrb[0].mxu0 %v2430
    %v2664 = vpop.f32.mrb[0].mxu0
    %v2665 = vadd.f32 0.0, %v2664
    %v2666 = vpop.f32.mrb[0].mxu0
    %v2667 = vadd.f32 0.0, %v2666
    %v2668 = vpop.f32.mrb[0].mxu0
    %v2669 = vadd.f32 0.0, %v2668
    %v2670 = vpop.f32.mrb[0].mxu0
    %v2671 = vadd.f32 0.0, %v2670
    %2672 = vdwg.mxu0
    %v2673 = vadd.f32 %v2251, %v2635
    %v2674 = vadd.f32 %v2252, %v2637
    %v2675 = vadd.f32 %v2253, %v2639
    %v2676 = vadd.f32 %v2254, %v2641
    %v2677 = vadd.f32 %v2255, %v2645
    %v2678 = vadd.f32 %v2256, %v2647
    %v2679 = vadd.f32 %v2257, %v2649
    %v2680 = vadd.f32 %v2258, %v2651
    %v2681 = vadd.f32 %v2259, %v2655
    %v2682 = vadd.f32 %v2260, %v2657
    %v2683 = vadd.f32 %v2261, %v2659
    %v2684 = vadd.f32 %v2262, %v2661
    %v2685 = vadd.f32 %v2263, %v2665
    %v2686 = vadd.f32 %v2264, %v2667
    %v2687 = vadd.f32 %v2265, %v2669
    %v2688 = vadd.f32 %v2266, %v2671
    %v2689 = vld [vmem:[#allocation2] sm:$0xee]
    %v2690 = vld [vmem:[#allocation2 + $0x18] sm:$0xee]
    %v2691 = vld [vmem:[#allocation2 + $0x30] sm:$0xee]
    %v2692 = vld [vmem:[#allocation2 + $0x48] sm:$0xee]
    %v2705 = vrot.slane %v2689, 5
    %v2706 = vrot.slane %v2705, 4
    %v2707 = vrot.slane %v2268, 5
    %v2708 = vsel %vm651, %v2706, %v2707
    %v2709 = vrot.slane %v2707, 4
    %v2710 = vrot.slane %v2269, 5
    %v2711 = vsel %vm651, %v2709, %v2710
    %v2712 = vrot.slane %v2690, 5
    %v2713 = vrot.slane %v2712, 4
    %v2714 = vrot.slane %v2271, 5
    %v2715 = vsel %vm651, %v2713, %v2714
    %v2716 = vrot.slane %v2714, 4
    %v2717 = vrot.slane %v2272, 5
    %v2718 = vsel %vm651, %v2716, %v2717
    %v2719 = vrot.slane %v2691, 5
    %v2720 = vrot.slane %v2719, 4
    %v2721 = vrot.slane %v2274, 5
    %v2722 = vsel %vm651, %v2720, %v2721
    %v2723 = vrot.slane %v2721, 4
    %v2724 = vrot.slane %v2275, 5
    %v2725 = vsel %vm651, %v2723, %v2724
    %v2726 = vrot.slane %v2692, 5
    %v2727 = vrot.slane %v2726, 4
    %v2728 = vrot.slane %v2277, 5
    %v2729 = vsel %vm651, %v2727, %v2728
    %v2730 = vrot.slane %v2728, 4
    %v2731 = vrot.slane %v2278, 5
    %v2732 = vsel %vm651, %v2730, %v2731
    %s2733 = scalar_lea.vmem %s4, 512
    %v2734 = vld [vmem:[%s2733] sm:$0xff]
    %v2735 = vld [vmem:[%s2733 + $0x8] sm:$0xff]
    %v2736 = vld [vmem:[%s2733 + $0x10] sm:$0xff]
    %v2737 = vld [vmem:[%s2733 + $0x18] sm:$0xff]
    %v2738 = vld [vmem:[%s2733 + $0x20] sm:$0xff]
    %v2739 = vld [vmem:[%s2733 + $0x28] sm:$0xff]
    %v2740 = vld [vmem:[%s2733 + $0x30] sm:$0xff]
    %v2741 = vld [vmem:[%s2733 + $0x38] sm:$0xff]
    %v2742 = vld [vmem:[%s2733 + $0x40] sm:$0xff]
    %v2743 = vld [vmem:[%s2733 + $0x48] sm:$0xff]
    %v2744 = vld [vmem:[%s2733 + $0x50] sm:$0xff]
    %v2745 = vld [vmem:[%s2733 + $0x58] sm:$0xff]
    %v2746 = vld [vmem:[%s2733 + $0x60] sm:$0xff]
    %v2747 = vld [vmem:[%s2733 + $0x68] sm:$0xff]
    %v2748 = vld [vmem:[%s2733 + $0x70] sm:$0xff]
    %v2749 = vld [vmem:[%s2733 + $0x78] sm:$0xff]
    %v2750 = vld [vmem:[%s2733 + $0x80] sm:$0xff]
    %v2751 = vld [vmem:[%s2733 + $0x88] sm:$0xff]
    %v2752 = vld [vmem:[%s2733 + $0x90] sm:$0xff]
    %v2753 = vld [vmem:[%s2733 + $0x98] sm:$0xff]
    %v2754 = vld [vmem:[%s2733 + $0xa0] sm:$0xff]
    %v2755 = vld [vmem:[%s2733 + $0xa8] sm:$0xff]
    %v2756 = vld [vmem:[%s2733 + $0xb0] sm:$0xff]
    %v2757 = vld [vmem:[%s2733 + $0xb8] sm:$0xff]
    %v2758 = vld [vmem:[%s2733 + $0xc0] sm:$0xff]
    %v2759 = vld [vmem:[%s2733 + $0xc8] sm:$0xff]
    %v2760 = vld [vmem:[%s2733 + $0xd0] sm:$0xff]
    %v2761 = vld [vmem:[%s2733 + $0xd8] sm:$0xff]
    %v2762 = vld [vmem:[%s2733 + $0xe0] sm:$0xff]
    %v2763 = vld [vmem:[%s2733 + $0xe8] sm:$0xff]
    %v2764 = vld [vmem:[%s2733 + $0xf0] sm:$0xff]
    %v2765 = vld [vmem:[%s2733 + $0xf8] sm:$0xff]
    %v2766 = vunpack.c.l.b16 %v2708
    %v2767 = vunpack.c.h.b16 %v2708
    %v2768 = vunpack.c.l.b16 %v2711
    %v2769 = vunpack.c.h.b16 %v2711
    %v2770 = vunpack.c.l.b16 %v2715
    %v2771 = vunpack.c.h.b16 %v2715
    %v2772 = vunpack.c.l.b16 %v2718
    %v2773 = vunpack.c.h.b16 %v2718
    %v2774 = vunpack.c.l.b16 %v2722
    %v2775 = vunpack.c.h.b16 %v2722
    %v2776 = vunpack.c.l.b16 %v2725
    %v2777 = vunpack.c.h.b16 %v2725
    %v2778 = vunpack.c.l.b16 %v2729
    %v2779 = vunpack.c.h.b16 %v2729
    %v2780 = vunpack.c.l.b16 %v2732
    %v2781 = vunpack.c.h.b16 %v2732
    %v2782 = vpack.c.b16 %v2768, %v2766
    %v2783 = vpack.c.b16 %v2769, %v2767
    %v2784 = vpack.c.b16 %v2772, %v2770
    %v2785 = vpack.c.b16 %v2773, %v2771
    %v2786 = vpack.c.b16 %v2776, %v2774
    %v2787 = vpack.c.b16 %v2777, %v2775
    %v2788 = vpack.c.b16 %v2780, %v2778
    %v2789 = vpack.c.b16 %v2781, %v2779
    %v2830 = vunpack.c.l.b16 %v2734
    %v2831 = vunpack.c.h.b16 %v2734
    %v2832 = vunpack.c.l.b16 %v2735
    %v2833 = vunpack.c.h.b16 %v2735
    %v2834 = vunpack.c.l.b16 %v2736
    %v2835 = vunpack.c.h.b16 %v2736
    %v2836 = vunpack.c.l.b16 %v2737
    %v2837 = vunpack.c.h.b16 %v2737
    %v2838 = vunpack.c.l.b16 %v2738
    %v2839 = vunpack.c.h.b16 %v2738
    %v2840 = vunpack.c.l.b16 %v2739
    %v2841 = vunpack.c.h.b16 %v2739
    %v2842 = vunpack.c.l.b16 %v2740
    %v2843 = vunpack.c.h.b16 %v2740
    %v2844 = vunpack.c.l.b16 %v2741
    %v2845 = vunpack.c.h.b16 %v2741
    %v2846 = vunpack.c.l.b16 %v2742
    %v2847 = vunpack.c.h.b16 %v2742
    %v2848 = vunpack.c.l.b16 %v2743
    %v2849 = vunpack.c.h.b16 %v2743
    %v2850 = vunpack.c.l.b16 %v2744
    %v2851 = vunpack.c.h.b16 %v2744
    %v2852 = vunpack.c.l.b16 %v2745
    %v2853 = vunpack.c.h.b16 %v2745
    %v2854 = vunpack.c.l.b16 %v2746
    %v2855 = vunpack.c.h.b16 %v2746
    %v2856 = vunpack.c.l.b16 %v2747
    %v2857 = vunpack.c.h.b16 %v2747
    %v2858 = vunpack.c.l.b16 %v2748
    %v2859 = vunpack.c.h.b16 %v2748
    %v2860 = vunpack.c.l.b16 %v2749
    %v2861 = vunpack.c.h.b16 %v2749
    %v2862 = vunpack.c.l.b16 %v2750
    %v2863 = vunpack.c.h.b16 %v2750
    %v2864 = vunpack.c.l.b16 %v2751
    %v2865 = vunpack.c.h.b16 %v2751
    %v2866 = vunpack.c.l.b16 %v2752
    %v2867 = vunpack.c.h.b16 %v2752
    %v2868 = vunpack.c.l.b16 %v2753
    %v2869 = vunpack.c.h.b16 %v2753
    %v2870 = vunpack.c.l.b16 %v2754
    %v2871 = vunpack.c.h.b16 %v2754
    %v2872 = vunpack.c.l.b16 %v2755
    %v2873 = vunpack.c.h.b16 %v2755
    %v2874 = vunpack.c.l.b16 %v2756
    %v2875 = vunpack.c.h.b16 %v2756
    %v2876 = vunpack.c.l.b16 %v2757
    %v2877 = vunpack.c.h.b16 %v2757
    %v2878 = vunpack.c.l.b16 %v2758
    %v2879 = vunpack.c.h.b16 %v2758
    %v2880 = vunpack.c.l.b16 %v2759
    %v2881 = vunpack.c.h.b16 %v2759
    %v2882 = vunpack.c.l.b16 %v2760
    %v2883 = vunpack.c.h.b16 %v2760
    %v2884 = vunpack.c.l.b16 %v2761
    %v2885 = vunpack.c.h.b16 %v2761
    %v2886 = vunpack.c.l.b16 %v2762
    %v2887 = vunpack.c.h.b16 %v2762
    %v2888 = vunpack.c.l.b16 %v2763
    %v2889 = vunpack.c.h.b16 %v2763
    %v2890 = vunpack.c.l.b16 %v2764
    %v2891 = vunpack.c.h.b16 %v2764
    %v2892 = vunpack.c.l.b16 %v2765
    %v2893 = vunpack.c.h.b16 %v2765
    %v2894 = vpack.c.b16 %v2832, %v2830
    %v2895 = vpack.c.b16 %v2833, %v2831
    %v2896 = vpack.c.b16 %v2836, %v2834
    %v2897 = vpack.c.b16 %v2837, %v2835
    %v2898 = vpack.c.b16 %v2840, %v2838
    %v2899 = vpack.c.b16 %v2841, %v2839
    %v2900 = vpack.c.b16 %v2844, %v2842
    %v2901 = vpack.c.b16 %v2845, %v2843
    %v2902 = vpack.c.b16 %v2848, %v2846
    %v2903 = vpack.c.b16 %v2849, %v2847
    %v2904 = vpack.c.b16 %v2852, %v2850
    %v2905 = vpack.c.b16 %v2853, %v2851
    %v2906 = vpack.c.b16 %v2856, %v2854
    %v2907 = vpack.c.b16 %v2857, %v2855
    %v2908 = vpack.c.b16 %v2860, %v2858
    %v2909 = vpack.c.b16 %v2861, %v2859
    %v2910 = vpack.c.b16 %v2864, %v2862
    %v2911 = vpack.c.b16 %v2865, %v2863
    %v2912 = vpack.c.b16 %v2868, %v2866
    %v2913 = vpack.c.b16 %v2869, %v2867
    %v2914 = vpack.c.b16 %v2872, %v2870
    %v2915 = vpack.c.b16 %v2873, %v2871
    %v2916 = vpack.c.b16 %v2876, %v2874
    %v2917 = vpack.c.b16 %v2877, %v2875
    %v2918 = vpack.c.b16 %v2880, %v2878
    %v2919 = vpack.c.b16 %v2881, %v2879
    %v2920 = vpack.c.b16 %v2884, %v2882
    %v2921 = vpack.c.b16 %v2885, %v2883
    %v2922 = vpack.c.b16 %v2888, %v2886
    %v2923 = vpack.c.b16 %v2889, %v2887
    %v2924 = vpack.c.b16 %v2892, %v2890
    %v2925 = vpack.c.b16 %v2893, %v2891
    %2958 = vmatprep.subr.bf16.mxu0 %v2895
    %2959 = vmatpush1.bf16.msra.mxu0 %v2894
    %2960 = vmatprep.subr.bf16.mxu0 %v2897
    %2961 = vmatpush1.bf16.msra.mxu0 %v2896
    %2962 = vmatprep.subr.bf16.mxu0 %v2899
    %2963 = vmatpush1.bf16.msra.mxu0 %v2898
    %2964 = vmatprep.subr.bf16.mxu0 %v2901
    %2965 = vmatpush1.bf16.msra.mxu0 %v2900
    %2966 = vmatprep.subr.bf16.mxu0 %v2903
    %2967 = vmatpush1.bf16.msra.mxu0 %v2902
    %2968 = vmatprep.subr.bf16.mxu0 %v2905
    %2969 = vmatpush1.bf16.msra.mxu0 %v2904
    %2970 = vmatprep.subr.bf16.mxu0 %v2907
    %2971 = vmatpush1.bf16.msra.mxu0 %v2906
    %2972 = vmatprep.subr.bf16.mxu0 %v2909
    %2973 = vmatpush1.bf16.msra.mxu0 %v2908
    %2974 = vmatprep.subr.bf16.mxu0 %v2911
    %2975 = vmatpush1.bf16.msra.mxu0 %v2910
    %2976 = vmatprep.subr.bf16.mxu0 %v2913
    %2977 = vmatpush1.bf16.msra.mxu0 %v2912
    %2978 = vmatprep.subr.bf16.mxu0 %v2915
    %2979 = vmatpush1.bf16.msra.mxu0 %v2914
    %2980 = vmatprep.subr.bf16.mxu0 %v2917
    %2981 = vmatpush1.bf16.msra.mxu0 %v2916
    %2982 = vmatprep.subr.bf16.mxu0 %v2919
    %2983 = vmatpush1.bf16.msra.mxu0 %v2918
    %2984 = vmatprep.subr.bf16.mxu0 %v2921
    %2985 = vmatpush1.bf16.msra.mxu0 %v2920
    %2986 = vmatprep.subr.bf16.mxu0 %v2923
    %2987 = vmatpush1.bf16.msra.mxu0 %v2922
    %2988 = vmatprep.subr.bf16.mxu0 %v2925
    %2989 = vmatpush1.bf16.msra.mxu0 %v2924
    %2990 = vmatprep.mubr.bf16.mxu0 %v2783
    %2991 = vmatmul.mubr.bf16.gmra.mrb[0].mxu0 %v2782
    %v2992 = vpop.f32.mrb[0].mxu0
    %v2993 = vadd.f32 0.0, %v2992
    %v2994 = vpop.f32.mrb[0].mxu0
    %v2995 = vadd.f32 0.0, %v2994
    %v2996 = vpop.f32.mrb[0].mxu0
    %v2997 = vadd.f32 0.0, %v2996
    %v2998 = vpop.f32.mrb[0].mxu0
    %v2999 = vadd.f32 0.0, %v2998
    %3000 = vmatprep.mubr.bf16.mxu0 %v2785
    %3001 = vmatmul.mubr.bf16.gmra.mrb[0].mxu0 %v2784
    %v3002 = vpop.f32.mrb[0].mxu0
    %v3003 = vadd.f32 0.0, %v3002
    %v3004 = vpop.f32.mrb[0].mxu0
    %v3005 = vadd.f32 0.0, %v3004
    %v3006 = vpop.f32.mrb[0].mxu0
    %v3007 = vadd.f32 0.0, %v3006
    %v3008 = vpop.f32.mrb[0].mxu0
    %v3009 = vadd.f32 0.0, %v3008
    %3010 = vmatprep.mubr.bf16.mxu0 %v2787
    %3011 = vmatmul.mubr.bf16.gmra.mrb[0].mxu0 %v2786
    %v3012 = vpop.f32.mrb[0].mxu0
    %v3013 = vadd.f32 0.0, %v3012
    %v3014 = vpop.f32.mrb[0].mxu0
    %v3015 = vadd.f32 0.0, %v3014
    %v3016 = vpop.f32.mrb[0].mxu0
    %v3017 = vadd.f32 0.0, %v3016
    %v3018 = vpop.f32.mrb[0].mxu0
    %v3019 = vadd.f32 0.0, %v3018
    %3020 = vmatprep.mubr.bf16.mxu0 %v2789
    %3021 = vmatmul.mubr.bf16.gmra.mrb[0].mxu0 %v2788
    %v3022 = vpop.f32.mrb[0].mxu0
    %v3023 = vadd.f32 0.0, %v3022
    %v3024 = vpop.f32.mrb[0].mxu0
    %v3025 = vadd.f32 0.0, %v3024
    %v3026 = vpop.f32.mrb[0].mxu0
    %v3027 = vadd.f32 0.0, %v3026
    %v3028 = vpop.f32.mrb[0].mxu0
    %v3029 = vadd.f32 0.0, %v3028
    %3030 = vdwg.mxu0
    %v3031 = vadd.f32 %v2673, %v2993
    %v3032 = vadd.f32 %v2674, %v2995
    %v3033 = vadd.f32 %v2675, %v2997
    %v3034 = vadd.f32 %v2676, %v2999
    %v3035 = vadd.f32 %v2677, %v3003
    %v3036 = vadd.f32 %v2678, %v3005
    %v3037 = vadd.f32 %v2679, %v3007
    %v3038 = vadd.f32 %v2680, %v3009
    %v3039 = vadd.f32 %v2681, %v3013
    %v3040 = vadd.f32 %v2682, %v3015
    %v3041 = vadd.f32 %v2683, %v3017
    %v3042 = vadd.f32 %v2684, %v3019
    %v3043 = vadd.f32 %v2685, %v3023
    %v3044 = vadd.f32 %v2686, %v3025
    %v3045 = vadd.f32 %v2687, %v3027
    %v3046 = vadd.f32 %v2688, %v3029
    %v3047 = vmax.f32 %v3031, 0.0
    %v3048 = vmax.f32 %v3032, 0.0
    %v3049 = vmax.f32 %v3033, 0.0
    %v3050 = vmax.f32 %v3034, 0.0
    %v3051 = vmax.f32 %v3035, 0.0
    %v3052 = vmax.f32 %v3036, 0.0
    %v3053 = vmax.f32 %v3037, 0.0
    %v3054 = vmax.f32 %v3038, 0.0
    %v3055 = vmax.f32 %v3039, 0.0
    %v3056 = vmax.f32 %v3040, 0.0
    %v3057 = vmax.f32 %v3041, 0.0
    %v3058 = vmax.f32 %v3042, 0.0
    %v3059 = vmax.f32 %v3043, 0.0
    %v3060 = vmax.f32 %v3044, 0.0
    %v3061 = vmax.f32 %v3045, 0.0
    %v3062 = vmax.f32 %v3046, 0.0
    %v3063 = vsub.f32 %v3047, %v3055
    %v3064 = vsub.f32 %v3048, %v3056
    %v3065 = vsub.f32 %v3049, %v3057
    %v3066 = vsub.f32 %v3050, %v3058
    %v3067 = vsub.f32 %v3051, %v3059
    %v3068 = vsub.f32 %v3052, %v3060
    %v3069 = vsub.f32 %v3053, %v3061
    %v3070 = vsub.f32 %v3054, %v3062
    %v3071 = vmul.f32 %v3063, %v3063
    %v3072 = vmul.f32 %v3064, %v3064
    %v3073 = vmul.f32 %v3065, %v3065
    %v3074 = vmul.f32 %v3066, %v3066
    %v3075 = vmul.f32 %v3067, %v3067
    %v3076 = vmul.f32 %v3068, %v3068
    %v3077 = vmul.f32 %v3069, %v3069
    %v3078 = vmul.f32 %v3070, %v3070
    %v3079 = vadd.f32 %v3071, %v3072
    %v3080 = vadd.f32 %v3079, %v3073
    %v3081 = vadd.f32 %v3080, %v3074
    %v3082 = vadd.f32 %v3081, %v3075
    %v3083 = vadd.f32 %v3082, %v3076
    %v3084 = vadd.f32 %v3083, %v3077
    %v3085 = vadd.f32 %v3084, %v3078
    %3086 = vadd.xlane.f32.xlu0 %v3085
    %v3087 = vpop.xlane.xlu0 %3086
    %v3088 = vrot.slane %v3087, 4
    %v3089 = vadd.f32 %v3087, %v3088
    %v3090 = vrot.slane %v3089, 2
    %v3091 = vadd.f32 %v3089, %v3090
    %v3092 = vrot.slane %v3091, 1
    %v3093 = vadd.f32 %v3091, %v3092
    %s3094 = vtos %v3093
    %s3095 = smul.f32 %s3094, 0.00012207031
    %s3096 = sadd.f32 %s839, %s3095
    %s3097 = scalar_lea.smem [#allocation4], 0
    %3098 = sst [smem:[%s3097]] %s3096
    // Predicated region
    $region34: #{_lambda_.1} parent=1 // pred_check
      _
    $region35: #{_lambda_.1} parent=1 // pred_check_branch
      %3100 = sbr.rel (0) target = $region37
    $region36: #{_lambda_.1} parent=1 // pred_region
      %s3102 = ssub.s32 16, 16
      %3103 = vsyncadd [#allocation5], %s3102
      %3106 = dma.smem_to_hbm [#allocation4], 16, %s8, [#allocation5]
    $region37: #{_lambda_.1} parent=1 // pred_fallthru
      _
    // Predicated region
    $region38: #{_lambda_.1} parent=1 // pred_check
      _
    $region39: #{_lambda_.1} parent=1 // pred_check_branch
      %3108 = sbr.rel (0) target = $region41
    $region40: #{_lambda_.1} parent=1 // pred_region
      %3109 = dma.done [#allocation5], 16
    $region41: #{_lambda_.1} parent=1 // pred_fallthru
      _
    %3110 = sfence
    %3111 = vsyncpa [#allocation5], 1

</llo_original>
